<compile_context>
chip_gen: v7x
topology: tpu7x:2x2x1
jax: 0.10.0
libtpu: 0.0.40
codegen_flags: <defaults>
</compile_context>

<pallas_src>
import jax
import jax.numpy as jnp
from jax import lax
from jax.experimental import pallas as pl
from jax.experimental.pallas import tpu as pltpu
import numpy as np

# ---- scaled-down hyperparameters (module defaults: n_inputs=700, net=450, labels=20) ----
N_INPUTS = 64
NET_SIZE = 128
LABELS = 20
LABELS_PAD = 128        # lane-dense readout / logits
BATCH = 8               # multiple of 8 -> sublane-aligned phase-2/3 slices
T_STEPS = 8

LEAK1 = 15.0
LEAK2 = 5.0
V_TH = 1.0
BETA1 = float(np.exp(-1.0 / LEAK1))
BETA2 = float(np.exp(-1.0 / LEAK2))


# ------------------------------- Pallas kernel ------------------------------------
def bptt_audio_kernel(x_ref, w1_ref, wrec_ref, b1_ref, w2_ref, b2_ref,
                      out_ref, spk_ref):
    """Single invocation: unrolled time recurrence + batched readout.

    x_ref   : (T, B, N_INPUTS) bf16
    w1_ref  : (N_INPUTS, NET_SIZE) bf16
    wrec_ref: (NET_SIZE, NET_SIZE) bf16
    b1_ref  : (1, NET_SIZE) f32
    w2_ref  : (NET_SIZE, LABELS_PAD) f32
    b2_ref  : (1, LABELS_PAD) f32
    out_ref : (T, B, LABELS_PAD) f32
    spk_ref : (T*B, NET_SIZE) bf16 VMEM scratch (spike history)
    """
    T = x_ref.shape[0]
    B = x_ref.shape[1]

    # Hoisted loads / broadcasts (JAX does not CSE broadcast_in_dim; an
    # unrolled loop would otherwise emit T copies of each of these).
    w1 = w1_ref[...]                                          # (N_IN, NET) bf16
    wrec = wrec_ref[...]                                      # (NET, NET)  bf16
    b1 = jnp.broadcast_to(b1_ref[...], (B, NET_SIZE))         # (B, NET)    f32

    # ---- Phase 1: LIF1 recurrence, fully unrolled over time (static T) ----
    v1 = jnp.zeros((B, NET_SIZE), jnp.float32)
    spike_bf = jnp.zeros((B, NET_SIZE), jnp.bfloat16)
    for t in range(T):  # static full unroll of the sequential time loop
        # Feed-forward + recurrent halves as two bf16 MXU matmuls, f32 acc.
        # At t==0 spike_bf is all-zero -> recurrent contribution is exactly 0,
        # matching `x1 = 0` on the first step of the PyTorch module.
        cur = (jnp.dot(x_ref[t], w1, preferred_element_type=jnp.float32)
               + jnp.dot(spike_bf, wrec, preferred_element_type=jnp.float32)
               + b1)
        v1 = BETA1 * v1 + cur
        fired = v1 > V_TH                      # single compare, reused below
        spike_bf = fired.astype(jnp.bfloat16)  # 0/1, exact in bf16
        v1 = jnp.where(fired, v1 - V_TH, v1)   # soft reset
        spk_ref[pl.ds(t * B, B), :] = spike_bf # spike history -> VMEM scratch

    # ---- Phase 2: readout hoisted out of the recurrence ----
    # One (T*B, NET) x (NET, 128) matmul; spikes are exact 0/1 so casting back
    # to f32 and using the f32 W2 keeps the nn.Linear readout bit-exact.
    s_all = spk_ref[...].astype(jnp.float32)                  # (T*B, NET)
    out_all = (jnp.dot(s_all, w2_ref[...],
                       preferred_element_type=jnp.float32)
               + b2_ref[...])                                 # (T*B, 128)

    # ---- Phase 3: LIF2 (accumulate=True, leak=5): cheap VPU recurrence ----
    v2 = jnp.zeros((B, LABELS_PAD), jnp.float32)
    for t in range(T):
        v2 = BETA2 * v2 + out_all[t * B:(t + 1) * B]
        out_ref[t] = v2                        # dense, unmasked (B, 128) store


# --------------------------- parameter packing (plain JAX glue) --------------------
def pack_inputs(x_seq, w1, b1, wrec, w2, b2):
    """Cast / pad parameters for the kernel (one-time static preprocessing)."""
    x_bf = x_seq.astype(jnp.bfloat16)                         # (T, B, N_IN)
    w1_bf = w1.astype(jnp.bfloat16)                           # (N_IN, NET)
    wrec_bf = wrec.astype(jnp.bfloat16)                       # (NET, NET)
    w2_pad = (jnp.zeros((NET_SIZE, LABELS_PAD), jnp.float32)
              .at[:, :LABELS].set(w2))                        # (NET, 128) f32
    b2_pad = jnp.zeros((1, LABELS_PAD), jnp.float32).at[:, :LABELS].set(b2)
    return x_bf, w1_bf, wrec_bf, b1, w2_pad, b2_pad


def run_bptt_audio(x_seq, w1, b1, wrec, w2, b2):
    x_bf, w1_bf, wrec_bf, b1p, w2_pad, b2_pad = pack_inputs(
        x_seq, w1, b1, wrec, w2, b2)
    T, B, n_in = x_bf.shape

    logits_pad = pl.pallas_call(
        bptt_audio_kernel,
        out_shape=jax.ShapeDtypeStruct((T, B, LABELS_PAD), jnp.float32),
        grid_spec=pltpu.PrefetchScalarGridSpec(
            num_scalar_prefetch=0,
            grid=(1,),  # single invocation; time loop is fused inside the kernel
            in_specs=[
                pl.BlockSpec((T, B, n_in), lambda i: (0, 0, 0)),          # x (bf16)
                pl.BlockSpec((n_in, NET_SIZE), lambda i: (0, 0)),         # W1 (bf16)
                pl.BlockSpec((NET_SIZE, NET_SIZE), lambda i: (0, 0)),     # Wrec (bf16)
                pl.BlockSpec((1, NET_SIZE), lambda i: (0, 0)),            # b1 (f32)
                pl.BlockSpec((NET_SIZE, LABELS_PAD), lambda i: (0, 0)),   # W2 (f32)
                pl.BlockSpec((1, LABELS_PAD), lambda i: (0, 0)),          # b2 (f32)
            ],
            out_specs=pl.BlockSpec((T, B, LABELS_PAD), lambda i: (0, 0, 0)),
            scratch_shapes=[pltpu.VMEM((T * B, NET_SIZE), jnp.bfloat16)],
        ),
        compiler_params=pltpu.CompilerParams(
            dimension_semantics=("arbitrary",)),
    )(x_bf, w1_bf, wrec_bf, b1p, w2_pad, b2_pad)

    return logits_pad[..., :LABELS]


# --------------------------- parameter setup (plain JAX glue) ----------------------
def kaiming_normal(key, out_f, in_f):
    # kaiming_normal_ default: std = sqrt(2 / fan_in)
    return jax.random.normal(key, (out_f, in_f), jnp.float32) * np.sqrt(2.0 / in_f)


def scaled_ws(weight_oi, gain, eps=1e-4):
    # ScaledWSLinear standardization over input dim (dim=1 of [out, in]).
    fan_in = weight_oi.shape[1]
    mean = jnp.mean(weight_oi, axis=1, keepdims=True)
    var = jnp.var(weight_oi, axis=1, keepdims=True, ddof=1)
    return gain * (weight_oi - mean) / jnp.sqrt(var * fan_in + eps)


def make_params(key):
    k1, k2, k3 = jax.random.split(key, 3)
    w1_raw = kaiming_normal(k1, NET_SIZE, N_INPUTS)       # linear1.weight   [out,in]
    wrec_raw = kaiming_normal(k2, NET_SIZE, NET_SIZE)     # linear1_rec.weight
    w2_raw = kaiming_normal(k3, LABELS, NET_SIZE)         # last_layer.weight
    g1 = jnp.ones((NET_SIZE, 1), jnp.float32)
    grec = jnp.ones((NET_SIZE, 1), jnp.float32)
    b1 = jnp.zeros((1, NET_SIZE), jnp.float32)
    b2 = jnp.zeros((1, LABELS), jnp.float32)
    # standardize once, transpose to [in, out] for the kernel's x @ W layout
    w1 = scaled_ws(w1_raw, g1).T
    wrec = scaled_ws(wrec_raw, grec).T
    w2 = w2_raw.T
    return w1, b1, wrec, w2, b2


# ------------------------------- pure-JAX reference --------------------------------
def reference(x_seq, w1, b1, wrec, w2, b2):
    # Uses the same packed parameters (same bf16 operand casts for layer 1) so
    # the comparison checks the Pallas lowering, not operand-cast noise.
    x_bf, w1_bf, wrec_bf, b1p, w2_pad, b2_pad = pack_inputs(
        x_seq, w1, b1, wrec, w2, b2)
    B = x_seq.shape[1]

    def step(carry, xt):
        spike_bf, v1, v2 = carry
        cur = (jnp.dot(xt, w1_bf, preferred_element_type=jnp.float32)
               + jnp.dot(spike_bf, wrec_bf, preferred_element_type=jnp.float32)
               + b1p)
        v1n = BETA1 * v1 + cur
        fired = v1n > V_TH
        s_bf = fired.astype(jnp.bfloat16)
        v1n = jnp.where(fired, v1n - V_TH, v1n)
        out = jnp.dot(s_bf.astype(jnp.float32), w2_pad,
                      preferred_element_type=jnp.float32) + b2_pad
        v2n = BETA2 * v2 + out
        return (s_bf, v1n, v2n), v2n

    carry0 = (jnp.zeros((B, NET_SIZE), jnp.bfloat16),
              jnp.zeros((B, NET_SIZE), jnp.float32),
              jnp.zeros((B, LABELS_PAD), jnp.float32))
    _, ys = lax.scan(step, carry0, x_bf)
    return ys[..., :LABELS]


if __name__ == "__main__":
    key = jax.random.PRNGKey(0)
    kx, kp = jax.random.split(key)
    x_seq = jax.random.normal(kx, (T_STEPS, BATCH, N_INPUTS), jnp.float32)
    w1, b1, wrec, w2, b2 = make_params(kp)

    logits = jax.block_until_ready(run_bptt_audio(x_seq, w1, b1, wrec, w2, b2))
    ref = jax.block_until_ready(reference(x_seq, w1, b1, wrec, w2, b2))
    np.testing.assert_allclose(np.asarray(logits), np.asarray(ref),
                               rtol=1e-4, atol=1e-4)

    print("KERNEL_OK")
</pallas_src>

<mosaic_0001>
module attributes {stable_mosaic.version = 11 : i64} {
  func.func @bptt_audio_kernel(%arg0: i32, %arg1: memref<8x8x64xbf16, #tpu.memory_space<vmem>>, %arg2: memref<64x128xbf16, #tpu.memory_space<vmem>>, %arg3: memref<128x128xbf16, #tpu.memory_space<vmem>>, %arg4: memref<1x128xf32, #tpu.memory_space<vmem>>, %arg5: memref<128x128xf32, #tpu.memory_space<vmem>>, %arg6: memref<1x128xf32, #tpu.memory_space<vmem>>, %arg7: memref<8x8x128xf32, #tpu.memory_space<vmem>>, %arg8: memref<64x128xbf16, #tpu.memory_space<vmem>>) attributes {dimension_semantics = [#tpu.dimension_semantics<arbitrary>], iteration_bounds = array<i64: 1>, scalar_prefetch = 0 : i64, scratch_operands = 1 : i64, tpu.core_type = #tpu.core_type<tc>, window_params = [{pipeline_mode = #tpu.pipeline_mode<synchronous>, transform_indices = @transform_0, window_bounds = array<i64: 8, 8, 64>}, {pipeline_mode = #tpu.pipeline_mode<synchronous>, transform_indices = @transform_1, window_bounds = array<i64: 64, 128>}, {pipeline_mode = #tpu.pipeline_mode<synchronous>, transform_indices = @transform_2, window_bounds = array<i64: 128, 128>}, {pipeline_mode = #tpu.pipeline_mode<synchronous>, transform_indices = @transform_3, window_bounds = array<i64: 1, 128>}, {pipeline_mode = #tpu.pipeline_mode<synchronous>, transform_indices = @transform_4, window_bounds = array<i64: 128, 128>}, {pipeline_mode = #tpu.pipeline_mode<synchronous>, transform_indices = @transform_5, window_bounds = array<i64: 1, 128>}, {pipeline_mode = #tpu.pipeline_mode<synchronous>, transform_indices = @transform_6, window_bounds = array<i64: 8, 8, 128>}]} {
    %c0 = arith.constant 0 : index
    %c0_0 = arith.constant 0 : index
    %0 = vector.load %arg2[%c0, %c0_0] : memref<64x128xbf16, #tpu.memory_space<vmem>>, vector<64x128xbf16>
    %c0_1 = arith.constant 0 : index
    %c0_2 = arith.constant 0 : index
    %1 = vector.load %arg3[%c0_1, %c0_2] : memref<128x128xbf16, #tpu.memory_space<vmem>>, vector<128x128xbf16>
    %c0_3 = arith.constant 0 : index
    %c0_4 = arith.constant 0 : index
    %2 = vector.load %arg4[%c0_3, %c0_4] : memref<1x128xf32, #tpu.memory_space<vmem>>, vector<1x128xf32>
    %3 = vector.shape_cast %2 : vector<1x128xf32> to vector<1x128xf32>
    %4 = vector.broadcast %3 : vector<1x128xf32> to vector<8x128xf32>
    %cst = arith.constant 0.000000e+00 : f32
    %5 = vector.broadcast %cst : f32 to vector<8x128xf32>
    %cst_5 = arith.constant 0.000000e+00 : bf16
    %6 = vector.broadcast %cst_5 : bf16 to vector<8x128xbf16>
    %c0_6 = arith.constant 0 : index
    %c0_7 = arith.constant 0 : index
    %c0_8 = arith.constant 0 : index
    %7 = vector.load %arg1[%c0_6, %c0_7, %c0_8] : memref<8x8x64xbf16, #tpu.memory_space<vmem>>, vector<1x8x64xbf16>
    %8 = vector.shape_cast %7 : vector<1x8x64xbf16> to vector<8x64xbf16>
    %cst_9 = arith.constant dense<0.000000e+00> : vector<8x128xf32>
    %9 = tpu.matmul %8, %0, %cst_9 {dimension_numbers = #tpu.dot_dimension_numbers<[1], [0], [0], [1], [0, 0, 1, 1], [], []>} : vector<8x64xbf16>, vector<64x128xbf16>, vector<8x128xf32> -> vector<8x128xf32>
    %cst_10 = arith.constant dense<0.000000e+00> : vector<8x128xf32>
    %10 = tpu.matmul %6, %1, %cst_10 {dimension_numbers = #tpu.dot_dimension_numbers<[1], [0], [0], [1], [0, 0, 1, 1], [], []>} : vector<8x128xbf16>, vector<128x128xbf16>, vector<8x128xf32> -> vector<8x128xf32>
    %11 = arith.addf %9, %10 : vector<8x128xf32>
    %12 = arith.addf %11, %4 : vector<8x128xf32>
    %cst_11 = arith.constant 0.935506999 : f32
    %13 = vector.broadcast %cst_11 : f32 to vector<8x128xf32>
    %14 = arith.mulf %13, %5 : vector<8x128xf32>
    %15 = arith.addf %14, %12 : vector<8x128xf32>
    %cst_12 = arith.constant 1.000000e+00 : f32
    %16 = vector.broadcast %cst_12 : f32 to vector<8x128xf32>
    %17 = arith.cmpf ogt, %15, %16 : vector<8x128xf32>
    %18 = arith.extui %17 : vector<8x128xi1> to vector<8x128xi32>
    %19 = arith.sitofp %18 : vector<8x128xi32> to vector<8x128xf32>
    %20 = arith.truncf %19 : vector<8x128xf32> to vector<8x128xbf16>
    %cst_13 = arith.constant 1.000000e+00 : f32
    %21 = vector.broadcast %cst_13 : f32 to vector<8x128xf32>
    %22 = arith.subf %15, %21 : vector<8x128xf32>
    %23 = arith.select %17, %22, %15 : vector<8x128xi1>, vector<8x128xf32>
    %c0_14 = arith.constant 0 : index
    %c0_15 = arith.constant 0 : index
    %24 = vector.load %arg8[%c0_14, %c0_15] : memref<64x128xbf16, #tpu.memory_space<vmem>>, vector<8x128xbf16>
    tpu.vector_store %arg8[%c0_14, %c0_15], %20 {strides = array<i32>} : memref<64x128xbf16, #tpu.memory_space<vmem>>, vector<8x128xbf16>,
    %c1 = arith.constant 1 : index
    %c0_16 = arith.constant 0 : index
    %c0_17 = arith.constant 0 : index
    %25 = vector.load %arg1[%c1, %c0_16, %c0_17] : memref<8x8x64xbf16, #tpu.memory_space<vmem>>, vector<1x8x64xbf16>
    %26 = vector.shape_cast %25 : vector<1x8x64xbf16> to vector<8x64xbf16>
    %cst_18 = arith.constant dense<0.000000e+00> : vector<8x128xf32>
    %27 = tpu.matmul %26, %0, %cst_18 {dimension_numbers = #tpu.dot_dimension_numbers<[1], [0], [0], [1], [0, 0, 1, 1], [], []>} : vector<8x64xbf16>, vector<64x128xbf16>, vector<8x128xf32> -> vector<8x128xf32>
    %cst_19 = arith.constant dense<0.000000e+00> : vector<8x128xf32>
    %28 = tpu.matmul %20, %1, %cst_19 {dimension_numbers = #tpu.dot_dimension_numbers<[1], [0], [0], [1], [0, 0, 1, 1], [], []>} : vector<8x128xbf16>, vector<128x128xbf16>, vector<8x128xf32> -> vector<8x128xf32>
    %29 = arith.addf %27, %28 : vector<8x128xf32>
    %30 = arith.addf %29, %4 : vector<8x128xf32>
    %cst_20 = arith.constant 0.935506999 : f32
    %31 = vector.broadcast %cst_20 : f32 to vector<8x128xf32>
    %32 = arith.mulf %31, %23 : vector<8x128xf32>
    %33 = arith.addf %32, %30 : vector<8x128xf32>
    %cst_21 = arith.constant 1.000000e+00 : f32
    %34 = vector.broadcast %cst_21 : f32 to vector<8x128xf32>
    %35 = arith.cmpf ogt, %33, %34 : vector<8x128xf32>
    %36 = arith.extui %35 : vector<8x128xi1> to vector<8x128xi32>
    %37 = arith.sitofp %36 : vector<8x128xi32> to vector<8x128xf32>
    %38 = arith.truncf %37 : vector<8x128xf32> to vector<8x128xbf16>
    %cst_22 = arith.constant 1.000000e+00 : f32
    %39 = vector.broadcast %cst_22 : f32 to vector<8x128xf32>
    %40 = arith.subf %33, %39 : vector<8x128xf32>
    %41 = arith.select %35, %40, %33 : vector<8x128xi1>, vector<8x128xf32>
    %c8 = arith.constant 8 : index
    %c0_23 = arith.constant 0 : index
    %42 = vector.load %arg8[%c8, %c0_23] : memref<64x128xbf16, #tpu.memory_space<vmem>>, vector<8x128xbf16>
    tpu.vector_store %arg8[%c8, %c0_23], %38 {strides = array<i32>} : memref<64x128xbf16, #tpu.memory_space<vmem>>, vector<8x128xbf16>,
    %c2 = arith.constant 2 : index
    %c0_24 = arith.constant 0 : index
    %c0_25 = arith.constant 0 : index
    %43 = vector.load %arg1[%c2, %c0_24, %c0_25] : memref<8x8x64xbf16, #tpu.memory_space<vmem>>, vector<1x8x64xbf16>
    %44 = vector.shape_cast %43 : vector<1x8x64xbf16> to vector<8x64xbf16>
    %cst_26 = arith.constant dense<0.000000e+00> : vector<8x128xf32>
    %45 = tpu.matmul %44, %0, %cst_26 {dimension_numbers = #tpu.dot_dimension_numbers<[1], [0], [0], [1], [0, 0, 1, 1], [], []>} : vector<8x64xbf16>, vector<64x128xbf16>, vector<8x128xf32> -> vector<8x128xf32>
    %cst_27 = arith.constant dense<0.000000e+00> : vector<8x128xf32>
    %46 = tpu.matmul %38, %1, %cst_27 {dimension_numbers = #tpu.dot_dimension_numbers<[1], [0], [0], [1], [0, 0, 1, 1], [], []>} : vector<8x128xbf16>, vector<128x128xbf16>, vector<8x128xf32> -> vector<8x128xf32>
    %47 = arith.addf %45, %46 : vector<8x128xf32>
    %48 = arith.addf %47, %4 : vector<8x128xf32>
    %cst_28 = arith.constant 0.935506999 : f32
    %49 = vector.broadcast %cst_28 : f32 to vector<8x128xf32>
    %50 = arith.mulf %49, %41 : vector<8x128xf32>
    %51 = arith.addf %50, %48 : vector<8x128xf32>
    %cst_29 = arith.constant 1.000000e+00 : f32
    %52 = vector.broadcast %cst_29 : f32 to vector<8x128xf32>
    %53 = arith.cmpf ogt, %51, %52 : vector<8x128xf32>
    %54 = arith.extui %53 : vector<8x128xi1> to vector<8x128xi32>
    %55 = arith.sitofp %54 : vector<8x128xi32> to vector<8x128xf32>
    %56 = arith.truncf %55 : vector<8x128xf32> to vector<8x128xbf16>
    %cst_30 = arith.constant 1.000000e+00 : f32
    %57 = vector.broadcast %cst_30 : f32 to vector<8x128xf32>
    %58 = arith.subf %51, %57 : vector<8x128xf32>
    %59 = arith.select %53, %58, %51 : vector<8x128xi1>, vector<8x128xf32>
    %c16 = arith.constant 16 : index
    %c0_31 = arith.constant 0 : index
    %60 = vector.load %arg8[%c16, %c0_31] : memref<64x128xbf16, #tpu.memory_space<vmem>>, vector<8x128xbf16>
    tpu.vector_store %arg8[%c16, %c0_31], %56 {strides = array<i32>} : memref<64x128xbf16, #tpu.memory_space<vmem>>, vector<8x128xbf16>,
    %c3 = arith.constant 3 : index
    %c0_32 = arith.constant 0 : index
    %c0_33 = arith.constant 0 : index
    %61 = vector.load %arg1[%c3, %c0_32, %c0_33] : memref<8x8x64xbf16, #tpu.memory_space<vmem>>, vector<1x8x64xbf16>
    %62 = vector.shape_cast %61 : vector<1x8x64xbf16> to vector<8x64xbf16>
    %cst_34 = arith.constant dense<0.000000e+00> : vector<8x128xf32>
    %63 = tpu.matmul %62, %0, %cst_34 {dimension_numbers = #tpu.dot_dimension_numbers<[1], [0], [0], [1], [0, 0, 1, 1], [], []>} : vector<8x64xbf16>, vector<64x128xbf16>, vector<8x128xf32> -> vector<8x128xf32>
    %cst_35 = arith.constant dense<0.000000e+00> : vector<8x128xf32>
    %64 = tpu.matmul %56, %1, %cst_35 {dimension_numbers = #tpu.dot_dimension_numbers<[1], [0], [0], [1], [0, 0, 1, 1], [], []>} : vector<8x128xbf16>, vector<128x128xbf16>, vector<8x128xf32> -> vector<8x128xf32>
    %65 = arith.addf %63, %64 : vector<8x128xf32>
    %66 = arith.addf %65, %4 : vector<8x128xf32>
    %cst_36 = arith.constant 0.935506999 : f32
    %67 = vector.broadcast %cst_36 : f32 to vector<8x128xf32>
    %68 = arith.mulf %67, %59 : vector<8x128xf32>
    %69 = arith.addf %68, %66 : vector<8x128xf32>
    %cst_37 = arith.constant 1.000000e+00 : f32
    %70 = vector.broadcast %cst_37 : f32 to vector<8x128xf32>
    %71 = arith.cmpf ogt, %69, %70 : vector<8x128xf32>
    %72 = arith.extui %71 : vector<8x128xi1> to vector<8x128xi32>
    %73 = arith.sitofp %72 : vector<8x128xi32> to vector<8x128xf32>
    %74 = arith.truncf %73 : vector<8x128xf32> to vector<8x128xbf16>
    %cst_38 = arith.constant 1.000000e+00 : f32
    %75 = vector.broadcast %cst_38 : f32 to vector<8x128xf32>
    %76 = arith.subf %69, %75 : vector<8x128xf32>
    %77 = arith.select %71, %76, %69 : vector<8x128xi1>, vector<8x128xf32>
    %c24 = arith.constant 24 : index
    %c0_39 = arith.constant 0 : index
    %78 = vector.load %arg8[%c24, %c0_39] : memref<64x128xbf16, #tpu.memory_space<vmem>>, vector<8x128xbf16>
    tpu.vector_store %arg8[%c24, %c0_39], %74 {strides = array<i32>} : memref<64x128xbf16, #tpu.memory_space<vmem>>, vector<8x128xbf16>,
    %c4 = arith.constant 4 : index
    %c0_40 = arith.constant 0 : index
    %c0_41 = arith.constant 0 : index
    %79 = vector.load %arg1[%c4, %c0_40, %c0_41] : memref<8x8x64xbf16, #tpu.memory_space<vmem>>, vector<1x8x64xbf16>
    %80 = vector.shape_cast %79 : vector<1x8x64xbf16> to vector<8x64xbf16>
    %cst_42 = arith.constant dense<0.000000e+00> : vector<8x128xf32>
    %81 = tpu.matmul %80, %0, %cst_42 {dimension_numbers = #tpu.dot_dimension_numbers<[1], [0], [0], [1], [0, 0, 1, 1], [], []>} : vector<8x64xbf16>, vector<64x128xbf16>, vector<8x128xf32> -> vector<8x128xf32>
    %cst_43 = arith.constant dense<0.000000e+00> : vector<8x128xf32>
    %82 = tpu.matmul %74, %1, %cst_43 {dimension_numbers = #tpu.dot_dimension_numbers<[1], [0], [0], [1], [0, 0, 1, 1], [], []>} : vector<8x128xbf16>, vector<128x128xbf16>, vector<8x128xf32> -> vector<8x128xf32>
    %83 = arith.addf %81, %82 : vector<8x128xf32>
    %84 = arith.addf %83, %4 : vector<8x128xf32>
    %cst_44 = arith.constant 0.935506999 : f32
    %85 = vector.broadcast %cst_44 : f32 to vector<8x128xf32>
    %86 = arith.mulf %85, %77 : vector<8x128xf32>
    %87 = arith.addf %86, %84 : vector<8x128xf32>
    %cst_45 = arith.constant 1.000000e+00 : f32
    %88 = vector.broadcast %cst_45 : f32 to vector<8x128xf32>
    %89 = arith.cmpf ogt, %87, %88 : vector<8x128xf32>
    %90 = arith.extui %89 : vector<8x128xi1> to vector<8x128xi32>
    %91 = arith.sitofp %90 : vector<8x128xi32> to vector<8x128xf32>
    %92 = arith.truncf %91 : vector<8x128xf32> to vector<8x128xbf16>
    %cst_46 = arith.constant 1.000000e+00 : f32
    %93 = vector.broadcast %cst_46 : f32 to vector<8x128xf32>
    %94 = arith.subf %87, %93 : vector<8x128xf32>
    %95 = arith.select %89, %94, %87 : vector<8x128xi1>, vector<8x128xf32>
    %c32 = arith.constant 32 : index
    %c0_47 = arith.constant 0 : index
    %96 = vector.load %arg8[%c32, %c0_47] : memref<64x128xbf16, #tpu.memory_space<vmem>>, vector<8x128xbf16>
    tpu.vector_store %arg8[%c32, %c0_47], %92 {strides = array<i32>} : memref<64x128xbf16, #tpu.memory_space<vmem>>, vector<8x128xbf16>,
    %c5 = arith.constant 5 : index
    %c0_48 = arith.constant 0 : index
    %c0_49 = arith.constant 0 : index
    %97 = vector.load %arg1[%c5, %c0_48, %c0_49] : memref<8x8x64xbf16, #tpu.memory_space<vmem>>, vector<1x8x64xbf16>
    %98 = vector.shape_cast %97 : vector<1x8x64xbf16> to vector<8x64xbf16>
    %cst_50 = arith.constant dense<0.000000e+00> : vector<8x128xf32>
    %99 = tpu.matmul %98, %0, %cst_50 {dimension_numbers = #tpu.dot_dimension_numbers<[1], [0], [0], [1], [0, 0, 1, 1], [], []>} : vector<8x64xbf16>, vector<64x128xbf16>, vector<8x128xf32> -> vector<8x128xf32>
    %cst_51 = arith.constant dense<0.000000e+00> : vector<8x128xf32>
    %100 = tpu.matmul %92, %1, %cst_51 {dimension_numbers = #tpu.dot_dimension_numbers<[1], [0], [0], [1], [0, 0, 1, 1], [], []>} : vector<8x128xbf16>, vector<128x128xbf16>, vector<8x128xf32> -> vector<8x128xf32>
    %101 = arith.addf %99, %100 : vector<8x128xf32>
    %102 = arith.addf %101, %4 : vector<8x128xf32>
    %cst_52 = arith.constant 0.935506999 : f32
    %103 = vector.broadcast %cst_52 : f32 to vector<8x128xf32>
    %104 = arith.mulf %103, %95 : vector<8x128xf32>
    %105 = arith.addf %104, %102 : vector<8x128xf32>
    %cst_53 = arith.constant 1.000000e+00 : f32
    %106 = vector.broadcast %cst_53 : f32 to vector<8x128xf32>
    %107 = arith.cmpf ogt, %105, %106 : vector<8x128xf32>
    %108 = arith.extui %107 : vector<8x128xi1> to vector<8x128xi32>
    %109 = arith.sitofp %108 : vector<8x128xi32> to vector<8x128xf32>
    %110 = arith.truncf %109 : vector<8x128xf32> to vector<8x128xbf16>
    %cst_54 = arith.constant 1.000000e+00 : f32
    %111 = vector.broadcast %cst_54 : f32 to vector<8x128xf32>
    %112 = arith.subf %105, %111 : vector<8x128xf32>
    %113 = arith.select %107, %112, %105 : vector<8x128xi1>, vector<8x128xf32>
    %c40 = arith.constant 40 : index
    %c0_55 = arith.constant 0 : index
    %114 = vector.load %arg8[%c40, %c0_55] : memref<64x128xbf16, #tpu.memory_space<vmem>>, vector<8x128xbf16>
    tpu.vector_store %arg8[%c40, %c0_55], %110 {strides = array<i32>} : memref<64x128xbf16, #tpu.memory_space<vmem>>, vector<8x128xbf16>,
    %c6 = arith.constant 6 : index
    %c0_56 = arith.constant 0 : index
    %c0_57 = arith.constant 0 : index
    %115 = vector.load %arg1[%c6, %c0_56, %c0_57] : memref<8x8x64xbf16, #tpu.memory_space<vmem>>, vector<1x8x64xbf16>
    %116 = vector.shape_cast %115 : vector<1x8x64xbf16> to vector<8x64xbf16>
    %cst_58 = arith.constant dense<0.000000e+00> : vector<8x128xf32>
    %117 = tpu.matmul %116, %0, %cst_58 {dimension_numbers = #tpu.dot_dimension_numbers<[1], [0], [0], [1], [0, 0, 1, 1], [], []>} : vector<8x64xbf16>, vector<64x128xbf16>, vector<8x128xf32> -> vector<8x128xf32>
    %cst_59 = arith.constant dense<0.000000e+00> : vector<8x128xf32>
    %118 = tpu.matmul %110, %1, %cst_59 {dimension_numbers = #tpu.dot_dimension_numbers<[1], [0], [0], [1], [0, 0, 1, 1], [], []>} : vector<8x128xbf16>, vector<128x128xbf16>, vector<8x128xf32> -> vector<8x128xf32>
    %119 = arith.addf %117, %118 : vector<8x128xf32>
    %120 = arith.addf %119, %4 : vector<8x128xf32>
    %cst_60 = arith.constant 0.935506999 : f32
    %121 = vector.broadcast %cst_60 : f32 to vector<8x128xf32>
    %122 = arith.mulf %121, %113 : vector<8x128xf32>
    %123 = arith.addf %122, %120 : vector<8x128xf32>
    %cst_61 = arith.constant 1.000000e+00 : f32
    %124 = vector.broadcast %cst_61 : f32 to vector<8x128xf32>
    %125 = arith.cmpf ogt, %123, %124 : vector<8x128xf32>
    %126 = arith.extui %125 : vector<8x128xi1> to vector<8x128xi32>
    %127 = arith.sitofp %126 : vector<8x128xi32> to vector<8x128xf32>
    %128 = arith.truncf %127 : vector<8x128xf32> to vector<8x128xbf16>
    %cst_62 = arith.constant 1.000000e+00 : f32
    %129 = vector.broadcast %cst_62 : f32 to vector<8x128xf32>
    %130 = arith.subf %123, %129 : vector<8x128xf32>
    %131 = arith.select %125, %130, %123 : vector<8x128xi1>, vector<8x128xf32>
    %c48 = arith.constant 48 : index
    %c0_63 = arith.constant 0 : index
    %132 = vector.load %arg8[%c48, %c0_63] : memref<64x128xbf16, #tpu.memory_space<vmem>>, vector<8x128xbf16>
    tpu.vector_store %arg8[%c48, %c0_63], %128 {strides = array<i32>} : memref<64x128xbf16, #tpu.memory_space<vmem>>, vector<8x128xbf16>,
    %c7 = arith.constant 7 : index
    %c0_64 = arith.constant 0 : index
    %c0_65 = arith.constant 0 : index
    %133 = vector.load %arg1[%c7, %c0_64, %c0_65] : memref<8x8x64xbf16, #tpu.memory_space<vmem>>, vector<1x8x64xbf16>
    %134 = vector.shape_cast %133 : vector<1x8x64xbf16> to vector<8x64xbf16>
    %cst_66 = arith.constant dense<0.000000e+00> : vector<8x128xf32>
    %135 = tpu.matmul %134, %0, %cst_66 {dimension_numbers = #tpu.dot_dimension_numbers<[1], [0], [0], [1], [0, 0, 1, 1], [], []>} : vector<8x64xbf16>, vector<64x128xbf16>, vector<8x128xf32> -> vector<8x128xf32>
    %cst_67 = arith.constant dense<0.000000e+00> : vector<8x128xf32>
    %136 = tpu.matmul %128, %1, %cst_67 {dimension_numbers = #tpu.dot_dimension_numbers<[1], [0], [0], [1], [0, 0, 1, 1], [], []>} : vector<8x128xbf16>, vector<128x128xbf16>, vector<8x128xf32> -> vector<8x128xf32>
    %137 = arith.addf %135, %136 : vector<8x128xf32>
    %138 = arith.addf %137, %4 : vector<8x128xf32>
    %cst_68 = arith.constant 0.935506999 : f32
    %139 = vector.broadcast %cst_68 : f32 to vector<8x128xf32>
    %140 = arith.mulf %139, %131 : vector<8x128xf32>
    %141 = arith.addf %140, %138 : vector<8x128xf32>
    %cst_69 = arith.constant 1.000000e+00 : f32
    %142 = vector.broadcast %cst_69 : f32 to vector<8x128xf32>
    %143 = arith.cmpf ogt, %141, %142 : vector<8x128xf32>
    %144 = arith.extui %143 : vector<8x128xi1> to vector<8x128xi32>
    %145 = arith.sitofp %144 : vector<8x128xi32> to vector<8x128xf32>
    %146 = arith.truncf %145 : vector<8x128xf32> to vector<8x128xbf16>
    %c56 = arith.constant 56 : index
    %c0_70 = arith.constant 0 : index
    %147 = vector.load %arg8[%c56, %c0_70] : memref<64x128xbf16, #tpu.memory_space<vmem>>, vector<8x128xbf16>
    tpu.vector_store %arg8[%c56, %c0_70], %146 {strides = array<i32>} : memref<64x128xbf16, #tpu.memory_space<vmem>>, vector<8x128xbf16>,
    %c0_71 = arith.constant 0 : index
    %c0_72 = arith.constant 0 : index
    %148 = vector.load %arg8[%c0_71, %c0_72] : memref<64x128xbf16, #tpu.memory_space<vmem>>, vector<64x128xbf16>
    %149 = arith.extf %148 : vector<64x128xbf16> to vector<64x128xf32>
    %c0_73 = arith.constant 0 : index
    %c0_74 = arith.constant 0 : index
    %150 = vector.load %arg5[%c0_73, %c0_74] : memref<128x128xf32, #tpu.memory_space<vmem>>, vector<128x128xf32>
    %cst_75 = arith.constant dense<0.000000e+00> : vector<64x128xf32>
    %151 = tpu.matmul %149, %150, %cst_75 {dimension_numbers = #tpu.dot_dimension_numbers<[1], [0], [0], [1], [0, 0, 1, 1], [], []>} : vector<64x128xf32>, vector<128x128xf32>, vector<64x128xf32> -> vector<64x128xf32>
    %c0_76 = arith.constant 0 : index
    %c0_77 = arith.constant 0 : index
    %152 = vector.load %arg6[%c0_76, %c0_77] : memref<1x128xf32, #tpu.memory_space<vmem>>, vector<1x128xf32>
    %153 = vector.broadcast %152 : vector<1x128xf32> to vector<64x128xf32>
    %154 = arith.addf %151, %153 : vector<64x128xf32>
    %cst_78 = arith.constant 0.000000e+00 : f32
    %155 = vector.broadcast %cst_78 : f32 to vector<8x128xf32>
    %cst_79 = arith.constant 0.818730771 : f32
    %156 = vector.broadcast %cst_79 : f32 to vector<8x128xf32>
    %157 = arith.mulf %156, %155 : vector<8x128xf32>
    %158 = vector.extract_strided_slice %154 {offsets = [0, 0], sizes = [8, 128], strides = [1, 1]} : vector<64x128xf32> to vector<8x128xf32>
    %159 = arith.addf %157, %158 : vector<8x128xf32>
    %c0_80 = arith.constant 0 : index
    %c0_81 = arith.constant 0 : index
    %c0_82 = arith.constant 0 : index
    %160 = vector.load %arg7[%c0_80, %c0_81, %c0_82] : memref<8x8x128xf32, #tpu.memory_space<vmem>>, vector<1x8x128xf32>
    %161 = vector.shape_cast %160 : vector<1x8x128xf32> to vector<8x128xf32>
    %162 = vector.shape_cast %159 : vector<8x128xf32> to vector<1x8x128xf32>
    tpu.vector_store %arg7[%c0_80, %c0_81, %c0_82], %162 {strides = array<i32>} : memref<8x8x128xf32, #tpu.memory_space<vmem>>, vector<1x8x128xf32>,
    %cst_83 = arith.constant 0.818730771 : f32
    %163 = vector.broadcast %cst_83 : f32 to vector<8x128xf32>
    %164 = arith.mulf %163, %159 : vector<8x128xf32>
    %165 = vector.extract_strided_slice %154 {offsets = [8, 0], sizes = [8, 128], strides = [1, 1]} : vector<64x128xf32> to vector<8x128xf32>
    %166 = arith.addf %164, %165 : vector<8x128xf32>
    %c1_84 = arith.constant 1 : index
    %c0_85 = arith.constant 0 : index
    %c0_86 = arith.constant 0 : index
    %167 = vector.load %arg7[%c1_84, %c0_85, %c0_86] : memref<8x8x128xf32, #tpu.memory_space<vmem>>, vector<1x8x128xf32>
    %168 = vector.shape_cast %167 : vector<1x8x128xf32> to vector<8x128xf32>
    %169 = vector.shape_cast %166 : vector<8x128xf32> to vector<1x8x128xf32>
    tpu.vector_store %arg7[%c1_84, %c0_85, %c0_86], %169 {strides = array<i32>} : memref<8x8x128xf32, #tpu.memory_space<vmem>>, vector<1x8x128xf32>,
    %cst_87 = arith.constant 0.818730771 : f32
    %170 = vector.broadcast %cst_87 : f32 to vector<8x128xf32>
    %171 = arith.mulf %170, %166 : vector<8x128xf32>
    %172 = vector.extract_strided_slice %154 {offsets = [16, 0], sizes = [8, 128], strides = [1, 1]} : vector<64x128xf32> to vector<8x128xf32>
    %173 = arith.addf %171, %172 : vector<8x128xf32>
    %c2_88 = arith.constant 2 : index
    %c0_89 = arith.constant 0 : index
    %c0_90 = arith.constant 0 : index
    %174 = vector.load %arg7[%c2_88, %c0_89, %c0_90] : memref<8x8x128xf32, #tpu.memory_space<vmem>>, vector<1x8x128xf32>
    %175 = vector.shape_cast %174 : vector<1x8x128xf32> to vector<8x128xf32>
    %176 = vector.shape_cast %173 : vector<8x128xf32> to vector<1x8x128xf32>
    tpu.vector_store %arg7[%c2_88, %c0_89, %c0_90], %176 {strides = array<i32>} : memref<8x8x128xf32, #tpu.memory_space<vmem>>, vector<1x8x128xf32>,
    %cst_91 = arith.constant 0.818730771 : f32
    %177 = vector.broadcast %cst_91 : f32 to vector<8x128xf32>
    %178 = arith.mulf %177, %173 : vector<8x128xf32>
    %179 = vector.extract_strided_slice %154 {offsets = [24, 0], sizes = [8, 128], strides = [1, 1]} : vector<64x128xf32> to vector<8x128xf32>
    %180 = arith.addf %178, %179 : vector<8x128xf32>
    %c3_92 = arith.constant 3 : index
    %c0_93 = arith.constant 0 : index
    %c0_94 = arith.constant 0 : index
    %181 = vector.load %arg7[%c3_92, %c0_93, %c0_94] : memref<8x8x128xf32, #tpu.memory_space<vmem>>, vector<1x8x128xf32>
    %182 = vector.shape_cast %181 : vector<1x8x128xf32> to vector<8x128xf32>
    %183 = vector.shape_cast %180 : vector<8x128xf32> to vector<1x8x128xf32>
    tpu.vector_store %arg7[%c3_92, %c0_93, %c0_94], %183 {strides = array<i32>} : memref<8x8x128xf32, #tpu.memory_space<vmem>>, vector<1x8x128xf32>,
    %cst_95 = arith.constant 0.818730771 : f32
    %184 = vector.broadcast %cst_95 : f32 to vector<8x128xf32>
    %185 = arith.mulf %184, %180 : vector<8x128xf32>
    %186 = vector.extract_strided_slice %154 {offsets = [32, 0], sizes = [8, 128], strides = [1, 1]} : vector<64x128xf32> to vector<8x128xf32>
    %187 = arith.addf %185, %186 : vector<8x128xf32>
    %c4_96 = arith.constant 4 : index
    %c0_97 = arith.constant 0 : index
    %c0_98 = arith.constant 0 : index
    %188 = vector.load %arg7[%c4_96, %c0_97, %c0_98] : memref<8x8x128xf32, #tpu.memory_space<vmem>>, vector<1x8x128xf32>
    %189 = vector.shape_cast %188 : vector<1x8x128xf32> to vector<8x128xf32>
    %190 = vector.shape_cast %187 : vector<8x128xf32> to vector<1x8x128xf32>
    tpu.vector_store %arg7[%c4_96, %c0_97, %c0_98], %190 {strides = array<i32>} : memref<8x8x128xf32, #tpu.memory_space<vmem>>, vector<1x8x128xf32>,
    %cst_99 = arith.constant 0.818730771 : f32
    %191 = vector.broadcast %cst_99 : f32 to vector<8x128xf32>
    %192 = arith.mulf %191, %187 : vector<8x128xf32>
    %193 = vector.extract_strided_slice %154 {offsets = [40, 0], sizes = [8, 128], strides = [1, 1]} : vector<64x128xf32> to vector<8x128xf32>
    %194 = arith.addf %192, %193 : vector<8x128xf32>
    %c5_100 = arith.constant 5 : index
    %c0_101 = arith.constant 0 : index
    %c0_102 = arith.constant 0 : index
    %195 = vector.load %arg7[%c5_100, %c0_101, %c0_102] : memref<8x8x128xf32, #tpu.memory_space<vmem>>, vector<1x8x128xf32>
    %196 = vector.shape_cast %195 : vector<1x8x128xf32> to vector<8x128xf32>
    %197 = vector.shape_cast %194 : vector<8x128xf32> to vector<1x8x128xf32>
    tpu.vector_store %arg7[%c5_100, %c0_101, %c0_102], %197 {strides = array<i32>} : memref<8x8x128xf32, #tpu.memory_space<vmem>>, vector<1x8x128xf32>,
    %cst_103 = arith.constant 0.818730771 : f32
    %198 = vector.broadcast %cst_103 : f32 to vector<8x128xf32>
    %199 = arith.mulf %198, %194 : vector<8x128xf32>
    %200 = vector.extract_strided_slice %154 {offsets = [48, 0], sizes = [8, 128], strides = [1, 1]} : vector<64x128xf32> to vector<8x128xf32>
    %201 = arith.addf %199, %200 : vector<8x128xf32>
    %c6_104 = arith.constant 6 : index
    %c0_105 = arith.constant 0 : index
    %c0_106 = arith.constant 0 : index
    %202 = vector.load %arg7[%c6_104, %c0_105, %c0_106] : memref<8x8x128xf32, #tpu.memory_space<vmem>>, vector<1x8x128xf32>
    %203 = vector.shape_cast %202 : vector<1x8x128xf32> to vector<8x128xf32>
    %204 = vector.shape_cast %201 : vector<8x128xf32> to vector<1x8x128xf32>
    tpu.vector_store %arg7[%c6_104, %c0_105, %c0_106], %204 {strides = array<i32>} : memref<8x8x128xf32, #tpu.memory_space<vmem>>, vector<1x8x128xf32>,
    %cst_107 = arith.constant 0.818730771 : f32
    %205 = vector.broadcast %cst_107 : f32 to vector<8x128xf32>
    %206 = arith.mulf %205, %201 : vector<8x128xf32>
    %207 = vector.extract_strided_slice %154 {offsets = [56, 0], sizes = [8, 128], strides = [1, 1]} : vector<64x128xf32> to vector<8x128xf32>
    %208 = arith.addf %206, %207 : vector<8x128xf32>
    %c7_108 = arith.constant 7 : index
    %c0_109 = arith.constant 0 : index
    %c0_110 = arith.constant 0 : index
    %209 = vector.load %arg7[%c7_108, %c0_109, %c0_110] : memref<8x8x128xf32, #tpu.memory_space<vmem>>, vector<1x8x128xf32>
    %210 = vector.shape_cast %209 : vector<1x8x128xf32> to vector<8x128xf32>
    %211 = vector.shape_cast %208 : vector<8x128xf32> to vector<1x8x128xf32>
    tpu.vector_store %arg7[%c7_108, %c0_109, %c0_110], %211 {strides = array<i32>} : memref<8x8x128xf32, #tpu.memory_space<vmem>>, vector<1x8x128xf32>,
    return
  }
  func.func @transform_0(%arg0: i32) -> (i32, i32, i32) {
    %c0_i32 = arith.constant 0 : i32
    %c0_i32_0 = arith.constant 0 : i32
    %c0_i32_1 = arith.constant 0 : i32
    %c0_i32_2 = arith.constant 0 : i32
    return %c0_i32, %c0_i32_0, %c0_i32_1 : i32, i32, i32
  }
  func.func @transform_1(%arg0: i32) -> (i32, i32) {
    %c0_i32 = arith.constant 0 : i32
    %c0_i32_0 = arith.constant 0 : i32
    %c0_i32_1 = arith.constant 0 : i32
    return %c0_i32, %c0_i32_0 : i32, i32
  }
  func.func @transform_2(%arg0: i32) -> (i32, i32) {
    %c0_i32 = arith.constant 0 : i32
    %c0_i32_0 = arith.constant 0 : i32
    %c0_i32_1 = arith.constant 0 : i32
    return %c0_i32, %c0_i32_0 : i32, i32
  }
  func.func @transform_3(%arg0: i32) -> (i32, i32) {
    %c0_i32 = arith.constant 0 : i32
    %c0_i32_0 = arith.constant 0 : i32
    %c0_i32_1 = arith.constant 0 : i32
    return %c0_i32, %c0_i32_0 : i32, i32
  }
  func.func @transform_4(%arg0: i32) -> (i32, i32) {
    %c0_i32 = arith.constant 0 : i32
    %c0_i32_0 = arith.constant 0 : i32
    %c0_i32_1 = arith.constant 0 : i32
    return %c0_i32, %c0_i32_0 : i32, i32
  }
  func.func @transform_5(%arg0: i32) -> (i32, i32) {
    %c0_i32 = arith.constant 0 : i32
    %c0_i32_0 = arith.constant 0 : i32
    %c0_i32_1 = arith.constant 0 : i32
    return %c0_i32, %c0_i32_0 : i32, i32
  }
  func.func @transform_6(%arg0: i32) -> (i32, i32, i32) {
    %c0_i32 = arith.constant 0 : i32
    %c0_i32_0 = arith.constant 0 : i32
    %c0_i32_1 = arith.constant 0 : i32
    %c0_i32_2 = arith.constant 0 : i32
    return %c0_i32, %c0_i32_0, %c0_i32_1 : i32, i32, i32
  }
}

</mosaic_0001>

<llo_original>
// kernel: tpu_custom_call.1
$region0: #{tpu_custom_call.1}
  #allocation0 [shape = 'u32[]', space=smem, size = 0x4, offset = 0x4, fixed_abs, tag = 'smem constant byte address 0x4 - core index']
  #allocation1 [shape = 'u32[144,128]{1,0:T(1,128)}', space=vmem, size = 0x12000, scoped, tag = 'internal scratch']
  #allocation2 [shape = 'bf16[64,128]{1,0:T(16,128)(2,1)}', space=vmem, size = 0x4000, scoped, tag = 'scratch operand']
  %s0 = inlined_call_operand.hbm [shape: bf16[8,8,64], index: 0, kind: input, shape index: {}]
  %s1 = inlined_call_operand.hbm [shape: bf16[64,128], index: 1, kind: input, shape index: {}]
  %s2 = inlined_call_operand.hbm [shape: bf16[128,128], index: 2, kind: input, shape index: {}]
  %s3 = inlined_call_operand.vmem [shape: f32[1,128], index: 3, kind: input, shape index: {}]
  %s4 = inlined_call_operand.hbm [shape: f32[128,128], index: 4, kind: input, shape index: {}]
  %s5 = inlined_call_operand.vmem [shape: f32[1,128], index: 5, kind: input, shape index: {}]
  %s6 = inlined_call_operand.hbm [shape: f32[8,8,128], index: 6, kind: output, shape index: {}]
  %s7 = sld [smem:[#allocation0]]
  $region50: #{tpu_custom_call.1} parent=0
    _
  %s9 = ssub.s32 1, %s7
  %s10 = scalar_select 0, %s9, %s7
  $region1: #{tpu_custom_call.1} parent=0
    #allocation3 [shape = 'u8[16384]{0}', space=vmem, size = 0x4000, scoped, tag = 'input window, operand 0, single buffered']
    #allocation4 [shape = 's32[1]{0}', space=sflag, size = 0x4, scoped, tag = 'scoped memory for tpu_custom_call.1']
    #allocation5 [shape = 's32[1]{0}', space=sflag, size = 0x4, scoped, tag = 'scoped memory for tpu_custom_call.1']
    #allocation6 [shape = 'u8[16384]{0}', space=vmem, size = 0x4000, scoped, tag = 'input window, operand 1, single buffered']
    #allocation7 [shape = 's32[1]{0}', space=sflag, size = 0x4, scoped, tag = 'scoped memory for tpu_custom_call.1']
    #allocation8 [shape = 'u8[32768]{0}', space=vmem, size = 0x8000, scoped, tag = 'input window, operand 2, single buffered']
    #allocation9 [shape = 'u8[65536]{0}', space=vmem, size = 0x10000, scoped, tag = 'input window, operand 4, single buffered']
    #allocation10 [shape = 's32[1]{0}', space=sflag, size = 0x4, scoped, tag = 'scoped memory for tpu_custom_call.1']
    #allocation11 [shape = 'u8[32768]{0}', space=vmem, size = 0x8000, scoped, tag = 'output window, operand 0, single buffered']
    %11 = vsyncpa [#allocation4], 0
    %12 = vsyncpa [#allocation7], 0
    %13 = vsyncpa [#allocation10], 0
    %14 = vsyncpa [#allocation5], 0
    // Predicated region
    $region2: #{tpu_custom_call.1} parent=1 // pred_check
      _
    $region3: #{tpu_custom_call.1} parent=1 // pred_check_branch
      %16 = sbr.rel (0) target = $region5
    $region4: #{tpu_custom_call.1} parent=1 // pred_region
      %s18 = ssub.s32 512, 512
      %19 = vsyncadd [#allocation4], %s18
      %s20 = sshll.u32 [#allocation3], 4
      %s21 = int_to_ptr.vmem [resolvable:$true] %s20
      %26 = dma.hbm_to_vmem [thread:$0]  %s0, 512, %s21, [#allocation4], 64, 64, 4
    $region5: #{tpu_custom_call.1} parent=1 // pred_fallthru
      _
    // Predicated region
    $region6: #{tpu_custom_call.1} parent=1 // pred_check
      _
    $region7: #{tpu_custom_call.1} parent=1 // pred_check_branch
      %28 = sbr.rel (0) target = $region9
    $region8: #{tpu_custom_call.1} parent=1 // pred_region
      %s30 = ssub.s32 512, 512
      %31 = vsyncadd [#allocation7], %s30
      %s32 = sshll.u32 [#allocation6], 4
      %s33 = int_to_ptr.vmem [resolvable:$true] %s32
      %38 = dma.hbm_to_vmem [thread:$0]  %s1, 512, %s33, [#allocation7], 64, 64, 4
    $region9: #{tpu_custom_call.1} parent=1 // pred_fallthru
      _
    // Predicated region
    $region10: #{tpu_custom_call.1} parent=1 // pred_check
      _
    $region11: #{tpu_custom_call.1} parent=1 // pred_check_branch
      %40 = sbr.rel (0) target = $region13
    $region12: #{tpu_custom_call.1} parent=1 // pred_region
      %s42 = ssub.s32 1024, 1024
      %43 = vsyncadd [#allocation7], %s42
      %s44 = sshll.u32 [#allocation8], 4
      %s45 = int_to_ptr.vmem [resolvable:$true] %s44
      %50 = dma.hbm_to_vmem [thread:$0]  %s2, 1024, %s45, [#allocation7], 64, 64, 4
    $region13: #{tpu_custom_call.1} parent=1 // pred_fallthru
      _
    // Predicated region
    $region14: #{tpu_custom_call.1} parent=1 // pred_check
      _
    $region15: #{tpu_custom_call.1} parent=1 // pred_check_branch
      %52 = sbr.rel (0) target = $region17
    $region16: #{tpu_custom_call.1} parent=1 // pred_region
      _
    $region17: #{tpu_custom_call.1} parent=1 // pred_fallthru
      _
    // Predicated region
    $region18: #{tpu_custom_call.1} parent=1 // pred_check
      _
    $region19: #{tpu_custom_call.1} parent=1 // pred_check_branch
      %54 = sbr.rel (0) target = $region21
    $region20: #{tpu_custom_call.1} parent=1 // pred_region
      %s56 = ssub.s32 2048, 2048
      %57 = vsyncadd [#allocation10], %s56
      %s58 = sshll.u32 [#allocation9], 4
      %s59 = int_to_ptr.vmem [resolvable:$true] %s58
      %64 = dma.hbm_to_vmem [thread:$0]  %s4, 2048, %s59, [#allocation10], 128, 128, 8
    $region21: #{tpu_custom_call.1} parent=1 // pred_fallthru
      _
    // Predicated region
    $region22: #{tpu_custom_call.1} parent=1 // pred_check
      _
    $region23: #{tpu_custom_call.1} parent=1 // pred_check_branch
      %66 = sbr.rel (0) target = $region25
    $region24: #{tpu_custom_call.1} parent=1 // pred_region
      _
    $region25: #{tpu_custom_call.1} parent=1 // pred_fallthru
      _
    // Predicated region
    $region26: #{tpu_custom_call.1} parent=1 // pred_check
      _
    $region27: #{tpu_custom_call.1} parent=1 // pred_check_branch
      %68 = sbr.rel (0) target = $region29
    $region28: #{tpu_custom_call.1} parent=1 // pred_region
      %69 = dma.done [#allocation4], 512
    $region29: #{tpu_custom_call.1} parent=1 // pred_fallthru
      _
    // Predicated region
    $region30: #{tpu_custom_call.1} parent=1 // pred_check
      _
    $region31: #{tpu_custom_call.1} parent=1 // pred_check_branch
      %71 = sbr.rel (0) target = $region33
    $region32: #{tpu_custom_call.1} parent=1 // pred_region
      %72 = dma.done [#allocation7], 512
    $region33: #{tpu_custom_call.1} parent=1 // pred_fallthru
      _
    // Predicated region
    $region34: #{tpu_custom_call.1} parent=1 // pred_check
      _
    $region35: #{tpu_custom_call.1} parent=1 // pred_check_branch
      %74 = sbr.rel (0) target = $region37
    $region36: #{tpu_custom_call.1} parent=1 // pred_region
      %75 = dma.done [#allocation7], 1024
    $region37: #{tpu_custom_call.1} parent=1 // pred_fallthru
      _
    // Predicated region
    $region38: #{tpu_custom_call.1} parent=1 // pred_check
      _
    $region39: #{tpu_custom_call.1} parent=1 // pred_check_branch
      %77 = sbr.rel (0) target = $region41
    $region40: #{tpu_custom_call.1} parent=1 // pred_region
      %78 = dma.done [#allocation10], 2048
    $region41: #{tpu_custom_call.1} parent=1 // pred_fallthru
      _
    %v80 = vld [vmem:[#allocation6] sm:$0xf]
    %v81 = vld [vmem:[#allocation6 + $0x4] sm:$0xf]
    %v82 = vld [vmem:[#allocation6 + $0x8] sm:$0xf]
    %v83 = vld [vmem:[#allocation6 + $0xc] sm:$0xf]
    %v84 = vld [vmem:[#allocation6 + $0x10] sm:$0xf]
    %v85 = vld [vmem:[#allocation6 + $0x14] sm:$0xf]
    %v86 = vld [vmem:[#allocation6 + $0x18] sm:$0xf]
    %v87 = vld [vmem:[#allocation6 + $0x1c] sm:$0xf]
    %v88 = vld [vmem:[#allocation8] sm:$0xf]
    %v89 = vld [vmem:[#allocation8 + $0x4] sm:$0xf]
    %v90 = vld [vmem:[#allocation8 + $0x8] sm:$0xf]
    %v91 = vld [vmem:[#allocation8 + $0xc] sm:$0xf]
    %v92 = vld [vmem:[#allocation8 + $0x10] sm:$0xf]
    %v93 = vld [vmem:[#allocation8 + $0x14] sm:$0xf]
    %v94 = vld [vmem:[#allocation8 + $0x18] sm:$0xf]
    %v95 = vld [vmem:[#allocation8 + $0x1c] sm:$0xf]
    %v96 = vld [vmem:[#allocation8 + $0x20] sm:$0xf]
    %v97 = vld [vmem:[#allocation8 + $0x24] sm:$0xf]
    %v98 = vld [vmem:[#allocation8 + $0x28] sm:$0xf]
    %v99 = vld [vmem:[#allocation8 + $0x2c] sm:$0xf]
    %v100 = vld [vmem:[#allocation8 + $0x30] sm:$0xf]
    %v101 = vld [vmem:[#allocation8 + $0x34] sm:$0xf]
    %v102 = vld [vmem:[#allocation8 + $0x38] sm:$0xf]
    %v103 = vld [vmem:[#allocation8 + $0x3c] sm:$0xf]
    %v104 = vld [vmem:[%s3] sm:$0x1]
    %v106 = vlaneseq
    %v107 = vshrl.u32 %v106, 7
    %v108 = vsub.s32 0, %v107
    %v109 = vrot.slane %v104, %v108
    %v111 = vld [vmem:[#allocation3] sm:$0xf]
    %v128 = vunpack.c.l.b16 %v88
    %v129 = vunpack.c.l.b16 %v89
    %v130 = vunpack.c.l.b16 %v90
    %v131 = vunpack.c.l.b16 %v91
    %v132 = vunpack.c.l.b16 %v92
    %v133 = vunpack.c.l.b16 %v93
    %v134 = vunpack.c.l.b16 %v94
    %v135 = vunpack.c.l.b16 %v95
    %v136 = vunpack.c.l.b16 %v96
    %v137 = vunpack.c.l.b16 %v97
    %v138 = vunpack.c.l.b16 %v98
    %v139 = vunpack.c.l.b16 %v99
    %v140 = vunpack.c.l.b16 %v100
    %v141 = vunpack.c.l.b16 %v101
    %v142 = vunpack.c.l.b16 %v102
    %v143 = vunpack.c.l.b16 %v103
    %v144 = vpack.c.b16 %v129, %v128
    %v145 = vpack.c.b16 %v131, %v130
    %v146 = vpack.c.b16 %v133, %v132
    %v147 = vpack.c.b16 %v135, %v134
    %v148 = vpack.c.b16 %v137, %v136
    %v149 = vpack.c.b16 %v139, %v138
    %v150 = vpack.c.b16 %v141, %v140
    %v151 = vpack.c.b16 %v143, %v142
    %160 = vmatprep.subr.bf16.mxu0 0
    %161 = vmatpush1.bf16.msra.mxu0 %v144
    %162 = vmatprep.subr.bf16.mxu0 0
    %163 = vmatpush1.bf16.msra.mxu0 %v145
    %164 = vmatprep.subr.bf16.mxu0 0
    %165 = vmatpush1.bf16.msra.mxu0 %v146
    %166 = vmatprep.subr.bf16.mxu0 0
    %167 = vmatpush1.bf16.msra.mxu0 %v147
    %168 = vmatprep.subr.bf16.mxu0 0
    %169 = vmatpush1.bf16.msra.mxu0 %v148
    %170 = vmatprep.subr.bf16.mxu0 0
    %171 = vmatpush1.bf16.msra.mxu0 %v149
    %172 = vmatprep.subr.bf16.mxu0 0
    %173 = vmatpush1.bf16.msra.mxu0 %v150
    %174 = vmatprep.subr.bf16.mxu0 0
    %175 = vmatpush1.bf16.msra.mxu0 %v151
    %176 = vmatprep.subr.bf16.mxu0 0
    %177 = vmatpush1.bf16.msra.mxu0 0
    %178 = vmatprep.subr.bf16.mxu0 0
    %179 = vmatpush1.bf16.msra.mxu0 0
    %180 = vmatprep.subr.bf16.mxu0 0
    %181 = vmatpush1.bf16.msra.mxu0 0
    %182 = vmatprep.subr.bf16.mxu0 0
    %183 = vmatpush1.bf16.msra.mxu0 0
    %184 = vmatprep.subr.bf16.mxu0 0
    %185 = vmatpush1.bf16.msra.mxu0 0
    %186 = vmatprep.subr.bf16.mxu0 0
    %187 = vmatpush1.bf16.msra.mxu0 0
    %188 = vmatprep.subr.bf16.mxu0 0
    %189 = vmatpush1.bf16.msra.mxu0 0
    %190 = vmatprep.subr.bf16.mxu0 0
    %191 = vmatpush1.bf16.msra.mxu0 0
    %192 = vmatprep.mubr.bf16.mxu0 0
    %193 = vmatmul.mubr.bf16.gmra.mrb[0].mxu0 0
    %v194 = vpop.f32.mrb[0].mxu0
    %v195 = vadd.f32 0.0, %v194
    %v196 = vpop.f32.mrb[0].mxu0
    %v197 = vpop.f32.mrb[0].mxu0
    %v198 = vpop.f32.mrb[0].mxu0
    %199 = vdwg.mxu0
    %v208 = vunpack.c.l.b16 %v80
    %v209 = vunpack.c.l.b16 %v81
    %v210 = vunpack.c.l.b16 %v82
    %v211 = vunpack.c.l.b16 %v83
    %v212 = vunpack.c.l.b16 %v84
    %v213 = vunpack.c.l.b16 %v85
    %v214 = vunpack.c.l.b16 %v86
    %v215 = vunpack.c.l.b16 %v87
    %v216 = vpack.c.b16 %v209, %v208
    %v217 = vpack.c.b16 %v211, %v210
    %v218 = vpack.c.b16 %v213, %v212
    %v219 = vpack.c.b16 %v215, %v214
    %vm224 = vcmask 523264
    %v226 = vsel %vm224, %v111, 0
    %228 = vmatprep.subr.bf16.mxu0 0
    %229 = vmatpush1.bf16.msra.mxu0 %v216
    %230 = vmatprep.subr.bf16.mxu0 0
    %231 = vmatpush1.bf16.msra.mxu0 %v217
    %232 = vmatprep.subr.bf16.mxu0 0
    %233 = vmatpush1.bf16.msra.mxu0 %v218
    %234 = vmatprep.subr.bf16.mxu0 0
    %235 = vmatpush1.bf16.msra.mxu0 %v219
    %236 = vmatprep.subr.bf16.mxu0 0
    %237 = vmatpush1.bf16.msra.mxu0 0
    %238 = vmatprep.subr.bf16.mxu0 0
    %239 = vmatpush1.bf16.msra.mxu0 0
    %240 = vmatprep.subr.bf16.mxu0 0
    %241 = vmatpush1.bf16.msra.mxu0 0
    %242 = vmatprep.subr.bf16.mxu0 0
    %243 = vmatpush1.bf16.msra.mxu0 0
    %244 = vmatprep.subr.bf16.mxu0 0
    %245 = vmatpush1.bf16.msra.mxu0 0
    %246 = vmatprep.subr.bf16.mxu0 0
    %247 = vmatpush1.bf16.msra.mxu0 0
    %248 = vmatprep.subr.bf16.mxu0 0
    %249 = vmatpush1.bf16.msra.mxu0 0
    %250 = vmatprep.subr.bf16.mxu0 0
    %251 = vmatpush1.bf16.msra.mxu0 0
    %252 = vmatprep.subr.bf16.mxu0 0
    %253 = vmatpush1.bf16.msra.mxu0 0
    %254 = vmatprep.subr.bf16.mxu0 0
    %255 = vmatpush1.bf16.msra.mxu0 0
    %256 = vmatprep.subr.bf16.mxu0 0
    %257 = vmatpush1.bf16.msra.mxu0 0
    %258 = vmatprep.subr.bf16.mxu0 0
    %259 = vmatpush1.bf16.msra.mxu0 0
    %260 = vmatprep.mubr.bf16.mxu0 0
    %261 = vmatmul.mubr.bf16.gmra.mrb[0].mxu0 %v226
    %v262 = vpop.f32.mrb[0].mxu0
    %v263 = vadd.f32 %v195, %v262
    %v264 = vpop.f32.mrb[0].mxu0
    %v265 = vpop.f32.mrb[0].mxu0
    %v266 = vpop.f32.mrb[0].mxu0
    %267 = vdwg.mxu0
    %v268 = vadd.f32 %v263, %v109
    %v269 = vadd.f32 %v268, 0.0
    %vm270 = vcmp.gt.f32.partialorder %v269, 1.0
    %v271 = vsel %vm270, 1, 0
    %v272 = vcvt.s32.f32 %v271
    %v273 = vpack.c.bf16 %v272, %v272
    %v274 = vsub.f32 %v269, 1.0
    %v275 = vsel %vm270, %v274, %v269
    %276 = vst [vmem:[#allocation2] sm:$0xf] %v273
    %s277 = scalar_lea.vmem [#allocation3], 4
    %v278 = vld [vmem:[%s277] sm:$0xf]
    %279 = vmatprep.subr.bf16.mxu0 0
    %280 = vmatpush1.bf16.msra.mxu0 %v144
    %281 = vmatprep.subr.bf16.mxu0 0
    %282 = vmatpush1.bf16.msra.mxu0 %v145
    %283 = vmatprep.subr.bf16.mxu0 0
    %284 = vmatpush1.bf16.msra.mxu0 %v146
    %285 = vmatprep.subr.bf16.mxu0 0
    %286 = vmatpush1.bf16.msra.mxu0 %v147
    %287 = vmatprep.subr.bf16.mxu0 0
    %288 = vmatpush1.bf16.msra.mxu0 %v148
    %289 = vmatprep.subr.bf16.mxu0 0
    %290 = vmatpush1.bf16.msra.mxu0 %v149
    %291 = vmatprep.subr.bf16.mxu0 0
    %292 = vmatpush1.bf16.msra.mxu0 %v150
    %293 = vmatprep.subr.bf16.mxu0 0
    %294 = vmatpush1.bf16.msra.mxu0 %v151
    %295 = vmatprep.subr.bf16.mxu0 0
    %296 = vmatpush1.bf16.msra.mxu0 0
    %297 = vmatprep.subr.bf16.mxu0 0
    %298 = vmatpush1.bf16.msra.mxu0 0
    %299 = vmatprep.subr.bf16.mxu0 0
    %300 = vmatpush1.bf16.msra.mxu0 0
    %301 = vmatprep.subr.bf16.mxu0 0
    %302 = vmatpush1.bf16.msra.mxu0 0
    %303 = vmatprep.subr.bf16.mxu0 0
    %304 = vmatpush1.bf16.msra.mxu0 0
    %305 = vmatprep.subr.bf16.mxu0 0
    %306 = vmatpush1.bf16.msra.mxu0 0
    %307 = vmatprep.subr.bf16.mxu0 0
    %308 = vmatpush1.bf16.msra.mxu0 0
    %309 = vmatprep.subr.bf16.mxu0 0
    %310 = vmatpush1.bf16.msra.mxu0 0
    %311 = vmatprep.mubr.bf16.mxu0 0
    %312 = vmatmul.mubr.bf16.gmra.mrb[0].mxu0 %v273
    %v313 = vpop.f32.mrb[0].mxu0
    %v314 = vadd.f32 0.0, %v313
    %v315 = vpop.f32.mrb[0].mxu0
    %v316 = vpop.f32.mrb[0].mxu0
    %v317 = vpop.f32.mrb[0].mxu0
    %318 = vdwg.mxu0
    %v320 = vsel %vm224, %v278, 0
    %322 = vmatprep.subr.bf16.mxu0 0
    %323 = vmatpush1.bf16.msra.mxu0 %v216
    %324 = vmatprep.subr.bf16.mxu0 0
    %325 = vmatpush1.bf16.msra.mxu0 %v217
    %326 = vmatprep.subr.bf16.mxu0 0
    %327 = vmatpush1.bf16.msra.mxu0 %v218
    %328 = vmatprep.subr.bf16.mxu0 0
    %329 = vmatpush1.bf16.msra.mxu0 %v219
    %330 = vmatprep.subr.bf16.mxu0 0
    %331 = vmatpush1.bf16.msra.mxu0 0
    %332 = vmatprep.subr.bf16.mxu0 0
    %333 = vmatpush1.bf16.msra.mxu0 0
    %334 = vmatprep.subr.bf16.mxu0 0
    %335 = vmatpush1.bf16.msra.mxu0 0
    %336 = vmatprep.subr.bf16.mxu0 0
    %337 = vmatpush1.bf16.msra.mxu0 0
    %338 = vmatprep.subr.bf16.mxu0 0
    %339 = vmatpush1.bf16.msra.mxu0 0
    %340 = vmatprep.subr.bf16.mxu0 0
    %341 = vmatpush1.bf16.msra.mxu0 0
    %342 = vmatprep.subr.bf16.mxu0 0
    %343 = vmatpush1.bf16.msra.mxu0 0
    %344 = vmatprep.subr.bf16.mxu0 0
    %345 = vmatpush1.bf16.msra.mxu0 0
    %346 = vmatprep.subr.bf16.mxu0 0
    %347 = vmatpush1.bf16.msra.mxu0 0
    %348 = vmatprep.subr.bf16.mxu0 0
    %349 = vmatpush1.bf16.msra.mxu0 0
    %350 = vmatprep.subr.bf16.mxu0 0
    %351 = vmatpush1.bf16.msra.mxu0 0
    %352 = vmatprep.subr.bf16.mxu0 0
    %353 = vmatpush1.bf16.msra.mxu0 0
    %354 = vmatprep.mubr.bf16.mxu0 0
    %355 = vmatmul.mubr.bf16.gmra.mrb[0].mxu0 %v320
    %v356 = vpop.f32.mrb[0].mxu0
    %v357 = vadd.f32 %v314, %v356
    %v358 = vpop.f32.mrb[0].mxu0
    %v359 = vpop.f32.mrb[0].mxu0
    %v360 = vpop.f32.mrb[0].mxu0
    %361 = vdwg.mxu0
    %v362 = vadd.f32 %v357, %v109
    %v363 = vmul.f32 %v275, 0.935507
    %v364 = vadd.f32 %v363, %v362
    %vm365 = vcmp.gt.f32.partialorder %v364, 1.0
    %v366 = vsel %vm365, 1, 0
    %v367 = vcvt.s32.f32 %v366
    %v368 = vpack.c.bf16 %v367, %v367
    %v369 = vsub.f32 %v364, 1.0
    %v370 = vsel %vm365, %v369, %v364
    %v372 = vrot.slane %v368, 4
    %374 = vst [vmem:[#allocation2] sm:$0xf0] %v372
    %s375 = scalar_lea.vmem [#allocation3], 8
    %v376 = vld [vmem:[%s375] sm:$0xf]
    %377 = vmatprep.subr.bf16.mxu0 0
    %378 = vmatpush1.bf16.msra.mxu0 %v144
    %379 = vmatprep.subr.bf16.mxu0 0
    %380 = vmatpush1.bf16.msra.mxu0 %v145
    %381 = vmatprep.subr.bf16.mxu0 0
    %382 = vmatpush1.bf16.msra.mxu0 %v146
    %383 = vmatprep.subr.bf16.mxu0 0
    %384 = vmatpush1.bf16.msra.mxu0 %v147
    %385 = vmatprep.subr.bf16.mxu0 0
    %386 = vmatpush1.bf16.msra.mxu0 %v148
    %387 = vmatprep.subr.bf16.mxu0 0
    %388 = vmatpush1.bf16.msra.mxu0 %v149
    %389 = vmatprep.subr.bf16.mxu0 0
    %390 = vmatpush1.bf16.msra.mxu0 %v150
    %391 = vmatprep.subr.bf16.mxu0 0
    %392 = vmatpush1.bf16.msra.mxu0 %v151
    %393 = vmatprep.subr.bf16.mxu0 0
    %394 = vmatpush1.bf16.msra.mxu0 0
    %395 = vmatprep.subr.bf16.mxu0 0
    %396 = vmatpush1.bf16.msra.mxu0 0
    %397 = vmatprep.subr.bf16.mxu0 0
    %398 = vmatpush1.bf16.msra.mxu0 0
    %399 = vmatprep.subr.bf16.mxu0 0
    %400 = vmatpush1.bf16.msra.mxu0 0
    %401 = vmatprep.subr.bf16.mxu0 0
    %402 = vmatpush1.bf16.msra.mxu0 0
    %403 = vmatprep.subr.bf16.mxu0 0
    %404 = vmatpush1.bf16.msra.mxu0 0
    %405 = vmatprep.subr.bf16.mxu0 0
    %406 = vmatpush1.bf16.msra.mxu0 0
    %407 = vmatprep.subr.bf16.mxu0 0
    %408 = vmatpush1.bf16.msra.mxu0 0
    %409 = vmatprep.mubr.bf16.mxu0 0
    %410 = vmatmul.mubr.bf16.gmra.mrb[0].mxu0 %v368
    %v411 = vpop.f32.mrb[0].mxu0
    %v412 = vadd.f32 0.0, %v411
    %v413 = vpop.f32.mrb[0].mxu0
    %v414 = vpop.f32.mrb[0].mxu0
    %v415 = vpop.f32.mrb[0].mxu0
    %416 = vdwg.mxu0
    %v418 = vsel %vm224, %v376, 0
    %420 = vmatprep.subr.bf16.mxu0 0
    %421 = vmatpush1.bf16.msra.mxu0 %v216
    %422 = vmatprep.subr.bf16.mxu0 0
    %423 = vmatpush1.bf16.msra.mxu0 %v217
    %424 = vmatprep.subr.bf16.mxu0 0
    %425 = vmatpush1.bf16.msra.mxu0 %v218
    %426 = vmatprep.subr.bf16.mxu0 0
    %427 = vmatpush1.bf16.msra.mxu0 %v219
    %428 = vmatprep.subr.bf16.mxu0 0
    %429 = vmatpush1.bf16.msra.mxu0 0
    %430 = vmatprep.subr.bf16.mxu0 0
    %431 = vmatpush1.bf16.msra.mxu0 0
    %432 = vmatprep.subr.bf16.mxu0 0
    %433 = vmatpush1.bf16.msra.mxu0 0
    %434 = vmatprep.subr.bf16.mxu0 0
    %435 = vmatpush1.bf16.msra.mxu0 0
    %436 = vmatprep.subr.bf16.mxu0 0
    %437 = vmatpush1.bf16.msra.mxu0 0
    %438 = vmatprep.subr.bf16.mxu0 0
    %439 = vmatpush1.bf16.msra.mxu0 0
    %440 = vmatprep.subr.bf16.mxu0 0
    %441 = vmatpush1.bf16.msra.mxu0 0
    %442 = vmatprep.subr.bf16.mxu0 0
    %443 = vmatpush1.bf16.msra.mxu0 0
    %444 = vmatprep.subr.bf16.mxu0 0
    %445 = vmatpush1.bf16.msra.mxu0 0
    %446 = vmatprep.subr.bf16.mxu0 0
    %447 = vmatpush1.bf16.msra.mxu0 0
    %448 = vmatprep.subr.bf16.mxu0 0
    %449 = vmatpush1.bf16.msra.mxu0 0
    %450 = vmatprep.subr.bf16.mxu0 0
    %451 = vmatpush1.bf16.msra.mxu0 0
    %452 = vmatprep.mubr.bf16.mxu0 0
    %453 = vmatmul.mubr.bf16.gmra.mrb[0].mxu0 %v418
    %v454 = vpop.f32.mrb[0].mxu0
    %v455 = vadd.f32 %v412, %v454
    %v456 = vpop.f32.mrb[0].mxu0
    %v457 = vpop.f32.mrb[0].mxu0
    %v458 = vpop.f32.mrb[0].mxu0
    %459 = vdwg.mxu0
    %v460 = vadd.f32 %v455, %v109
    %v461 = vmul.f32 %v370, 0.935507
    %v462 = vadd.f32 %v461, %v460
    %vm463 = vcmp.gt.f32.partialorder %v462, 1.0
    %v464 = vsel %vm463, 1, 0
    %v465 = vcvt.s32.f32 %v464
    %v466 = vpack.c.bf16 %v465, %v465
    %v467 = vsub.f32 %v462, 1.0
    %v468 = vsel %vm463, %v467, %v462
    %469 = vst [vmem:[#allocation2 + $0x8] sm:$0xf] %v466
    %s470 = scalar_lea.vmem [#allocation3], 12
    %v471 = vld [vmem:[%s470] sm:$0xf]
    %472 = vmatprep.subr.bf16.mxu0 0
    %473 = vmatpush1.bf16.msra.mxu0 %v144
    %474 = vmatprep.subr.bf16.mxu0 0
    %475 = vmatpush1.bf16.msra.mxu0 %v145
    %476 = vmatprep.subr.bf16.mxu0 0
    %477 = vmatpush1.bf16.msra.mxu0 %v146
    %478 = vmatprep.subr.bf16.mxu0 0
    %479 = vmatpush1.bf16.msra.mxu0 %v147
    %480 = vmatprep.subr.bf16.mxu0 0
    %481 = vmatpush1.bf16.msra.mxu0 %v148
    %482 = vmatprep.subr.bf16.mxu0 0
    %483 = vmatpush1.bf16.msra.mxu0 %v149
    %484 = vmatprep.subr.bf16.mxu0 0
    %485 = vmatpush1.bf16.msra.mxu0 %v150
    %486 = vmatprep.subr.bf16.mxu0 0
    %487 = vmatpush1.bf16.msra.mxu0 %v151
    %488 = vmatprep.subr.bf16.mxu0 0
    %489 = vmatpush1.bf16.msra.mxu0 0
    %490 = vmatprep.subr.bf16.mxu0 0
    %491 = vmatpush1.bf16.msra.mxu0 0
    %492 = vmatprep.subr.bf16.mxu0 0
    %493 = vmatpush1.bf16.msra.mxu0 0
    %494 = vmatprep.subr.bf16.mxu0 0
    %495 = vmatpush1.bf16.msra.mxu0 0
    %496 = vmatprep.subr.bf16.mxu0 0
    %497 = vmatpush1.bf16.msra.mxu0 0
    %498 = vmatprep.subr.bf16.mxu0 0
    %499 = vmatpush1.bf16.msra.mxu0 0
    %500 = vmatprep.subr.bf16.mxu0 0
    %501 = vmatpush1.bf16.msra.mxu0 0
    %502 = vmatprep.subr.bf16.mxu0 0
    %503 = vmatpush1.bf16.msra.mxu0 0
    %504 = vmatprep.mubr.bf16.mxu0 0
    %505 = vmatmul.mubr.bf16.gmra.mrb[0].mxu0 %v466
    %v506 = vpop.f32.mrb[0].mxu0
    %v507 = vadd.f32 0.0, %v506
    %v508 = vpop.f32.mrb[0].mxu0
    %v509 = vpop.f32.mrb[0].mxu0
    %v510 = vpop.f32.mrb[0].mxu0
    %511 = vdwg.mxu0
    %v513 = vsel %vm224, %v471, 0
    %515 = vmatprep.subr.bf16.mxu0 0
    %516 = vmatpush1.bf16.msra.mxu0 %v216
    %517 = vmatprep.subr.bf16.mxu0 0
    %518 = vmatpush1.bf16.msra.mxu0 %v217
    %519 = vmatprep.subr.bf16.mxu0 0
    %520 = vmatpush1.bf16.msra.mxu0 %v218
    %521 = vmatprep.subr.bf16.mxu0 0
    %522 = vmatpush1.bf16.msra.mxu0 %v219
    %523 = vmatprep.subr.bf16.mxu0 0
    %524 = vmatpush1.bf16.msra.mxu0 0
    %525 = vmatprep.subr.bf16.mxu0 0
    %526 = vmatpush1.bf16.msra.mxu0 0
    %527 = vmatprep.subr.bf16.mxu0 0
    %528 = vmatpush1.bf16.msra.mxu0 0
    %529 = vmatprep.subr.bf16.mxu0 0
    %530 = vmatpush1.bf16.msra.mxu0 0
    %531 = vmatprep.subr.bf16.mxu0 0
    %532 = vmatpush1.bf16.msra.mxu0 0
    %533 = vmatprep.subr.bf16.mxu0 0
    %534 = vmatpush1.bf16.msra.mxu0 0
    %535 = vmatprep.subr.bf16.mxu0 0
    %536 = vmatpush1.bf16.msra.mxu0 0
    %537 = vmatprep.subr.bf16.mxu0 0
    %538 = vmatpush1.bf16.msra.mxu0 0
    %539 = vmatprep.subr.bf16.mxu0 0
    %540 = vmatpush1.bf16.msra.mxu0 0
    %541 = vmatprep.subr.bf16.mxu0 0
    %542 = vmatpush1.bf16.msra.mxu0 0
    %543 = vmatprep.subr.bf16.mxu0 0
    %544 = vmatpush1.bf16.msra.mxu0 0
    %545 = vmatprep.subr.bf16.mxu0 0
    %546 = vmatpush1.bf16.msra.mxu0 0
    %547 = vmatprep.mubr.bf16.mxu0 0
    %548 = vmatmul.mubr.bf16.gmra.mrb[0].mxu0 %v513
    %v549 = vpop.f32.mrb[0].mxu0
    %v550 = vadd.f32 %v507, %v549
    %v551 = vpop.f32.mrb[0].mxu0
    %v552 = vpop.f32.mrb[0].mxu0
    %v553 = vpop.f32.mrb[0].mxu0
    %554 = vdwg.mxu0
    %v555 = vadd.f32 %v550, %v109
    %v556 = vmul.f32 %v468, 0.935507
    %v557 = vadd.f32 %v556, %v555
    %vm558 = vcmp.gt.f32.partialorder %v557, 1.0
    %v559 = vsel %vm558, 1, 0
    %v560 = vcvt.s32.f32 %v559
    %v561 = vpack.c.bf16 %v560, %v560
    %v562 = vsub.f32 %v557, 1.0
    %v563 = vsel %vm558, %v562, %v557
    %v565 = vrot.slane %v561, 4
    %567 = vst [vmem:[#allocation2 + $0x8] sm:$0xf0] %v565
    %s568 = scalar_lea.vmem [#allocation3], 16
    %v569 = vld [vmem:[%s568] sm:$0xf]
    %570 = vmatprep.subr.bf16.mxu0 0
    %571 = vmatpush1.bf16.msra.mxu0 %v144
    %572 = vmatprep.subr.bf16.mxu0 0
    %573 = vmatpush1.bf16.msra.mxu0 %v145
    %574 = vmatprep.subr.bf16.mxu0 0
    %575 = vmatpush1.bf16.msra.mxu0 %v146
    %576 = vmatprep.subr.bf16.mxu0 0
    %577 = vmatpush1.bf16.msra.mxu0 %v147
    %578 = vmatprep.subr.bf16.mxu0 0
    %579 = vmatpush1.bf16.msra.mxu0 %v148
    %580 = vmatprep.subr.bf16.mxu0 0
    %581 = vmatpush1.bf16.msra.mxu0 %v149
    %582 = vmatprep.subr.bf16.mxu0 0
    %583 = vmatpush1.bf16.msra.mxu0 %v150
    %584 = vmatprep.subr.bf16.mxu0 0
    %585 = vmatpush1.bf16.msra.mxu0 %v151
    %586 = vmatprep.subr.bf16.mxu0 0
    %587 = vmatpush1.bf16.msra.mxu0 0
    %588 = vmatprep.subr.bf16.mxu0 0
    %589 = vmatpush1.bf16.msra.mxu0 0
    %590 = vmatprep.subr.bf16.mxu0 0
    %591 = vmatpush1.bf16.msra.mxu0 0
    %592 = vmatprep.subr.bf16.mxu0 0
    %593 = vmatpush1.bf16.msra.mxu0 0
    %594 = vmatprep.subr.bf16.mxu0 0
    %595 = vmatpush1.bf16.msra.mxu0 0
    %596 = vmatprep.subr.bf16.mxu0 0
    %597 = vmatpush1.bf16.msra.mxu0 0
    %598 = vmatprep.subr.bf16.mxu0 0
    %599 = vmatpush1.bf16.msra.mxu0 0
    %600 = vmatprep.subr.bf16.mxu0 0
    %601 = vmatpush1.bf16.msra.mxu0 0
    %602 = vmatprep.mubr.bf16.mxu0 0
    %603 = vmatmul.mubr.bf16.gmra.mrb[0].mxu0 %v561
    %v604 = vpop.f32.mrb[0].mxu0
    %v605 = vadd.f32 0.0, %v604
    %v606 = vpop.f32.mrb[0].mxu0
    %v607 = vpop.f32.mrb[0].mxu0
    %v608 = vpop.f32.mrb[0].mxu0
    %609 = vdwg.mxu0
    %v611 = vsel %vm224, %v569, 0
    %613 = vmatprep.subr.bf16.mxu0 0
    %614 = vmatpush1.bf16.msra.mxu0 %v216
    %615 = vmatprep.subr.bf16.mxu0 0
    %616 = vmatpush1.bf16.msra.mxu0 %v217
    %617 = vmatprep.subr.bf16.mxu0 0
    %618 = vmatpush1.bf16.msra.mxu0 %v218
    %619 = vmatprep.subr.bf16.mxu0 0
    %620 = vmatpush1.bf16.msra.mxu0 %v219
    %621 = vmatprep.subr.bf16.mxu0 0
    %622 = vmatpush1.bf16.msra.mxu0 0
    %623 = vmatprep.subr.bf16.mxu0 0
    %624 = vmatpush1.bf16.msra.mxu0 0
    %625 = vmatprep.subr.bf16.mxu0 0
    %626 = vmatpush1.bf16.msra.mxu0 0
    %627 = vmatprep.subr.bf16.mxu0 0
    %628 = vmatpush1.bf16.msra.mxu0 0
    %629 = vmatprep.subr.bf16.mxu0 0
    %630 = vmatpush1.bf16.msra.mxu0 0
    %631 = vmatprep.subr.bf16.mxu0 0
    %632 = vmatpush1.bf16.msra.mxu0 0
    %633 = vmatprep.subr.bf16.mxu0 0
    %634 = vmatpush1.bf16.msra.mxu0 0
    %635 = vmatprep.subr.bf16.mxu0 0
    %636 = vmatpush1.bf16.msra.mxu0 0
    %637 = vmatprep.subr.bf16.mxu0 0
    %638 = vmatpush1.bf16.msra.mxu0 0
    %639 = vmatprep.subr.bf16.mxu0 0
    %640 = vmatpush1.bf16.msra.mxu0 0
    %641 = vmatprep.subr.bf16.mxu0 0
    %642 = vmatpush1.bf16.msra.mxu0 0
    %643 = vmatprep.subr.bf16.mxu0 0
    %644 = vmatpush1.bf16.msra.mxu0 0
    %645 = vmatprep.mubr.bf16.mxu0 0
    %646 = vmatmul.mubr.bf16.gmra.mrb[0].mxu0 %v611
    %v647 = vpop.f32.mrb[0].mxu0
    %v648 = vadd.f32 %v605, %v647
    %v649 = vpop.f32.mrb[0].mxu0
    %v650 = vpop.f32.mrb[0].mxu0
    %v651 = vpop.f32.mrb[0].mxu0
    %652 = vdwg.mxu0
    %v653 = vadd.f32 %v648, %v109
    %v654 = vmul.f32 %v563, 0.935507
    %v655 = vadd.f32 %v654, %v653
    %vm656 = vcmp.gt.f32.partialorder %v655, 1.0
    %v657 = vsel %vm656, 1, 0
    %v658 = vcvt.s32.f32 %v657
    %v659 = vpack.c.bf16 %v658, %v658
    %v660 = vsub.f32 %v655, 1.0
    %v661 = vsel %vm656, %v660, %v655
    %662 = vst [vmem:[#allocation2 + $0x10] sm:$0xf] %v659
    %s663 = scalar_lea.vmem [#allocation3], 20
    %v664 = vld [vmem:[%s663] sm:$0xf]
    %665 = vmatprep.subr.bf16.mxu0 0
    %666 = vmatpush1.bf16.msra.mxu0 %v144
    %667 = vmatprep.subr.bf16.mxu0 0
    %668 = vmatpush1.bf16.msra.mxu0 %v145
    %669 = vmatprep.subr.bf16.mxu0 0
    %670 = vmatpush1.bf16.msra.mxu0 %v146
    %671 = vmatprep.subr.bf16.mxu0 0
    %672 = vmatpush1.bf16.msra.mxu0 %v147
    %673 = vmatprep.subr.bf16.mxu0 0
    %674 = vmatpush1.bf16.msra.mxu0 %v148
    %675 = vmatprep.subr.bf16.mxu0 0
    %676 = vmatpush1.bf16.msra.mxu0 %v149
    %677 = vmatprep.subr.bf16.mxu0 0
    %678 = vmatpush1.bf16.msra.mxu0 %v150
    %679 = vmatprep.subr.bf16.mxu0 0
    %680 = vmatpush1.bf16.msra.mxu0 %v151
    %681 = vmatprep.subr.bf16.mxu0 0
    %682 = vmatpush1.bf16.msra.mxu0 0
    %683 = vmatprep.subr.bf16.mxu0 0
    %684 = vmatpush1.bf16.msra.mxu0 0
    %685 = vmatprep.subr.bf16.mxu0 0
    %686 = vmatpush1.bf16.msra.mxu0 0
    %687 = vmatprep.subr.bf16.mxu0 0
    %688 = vmatpush1.bf16.msra.mxu0 0
    %689 = vmatprep.subr.bf16.mxu0 0
    %690 = vmatpush1.bf16.msra.mxu0 0
    %691 = vmatprep.subr.bf16.mxu0 0
    %692 = vmatpush1.bf16.msra.mxu0 0
    %693 = vmatprep.subr.bf16.mxu0 0
    %694 = vmatpush1.bf16.msra.mxu0 0
    %695 = vmatprep.subr.bf16.mxu0 0
    %696 = vmatpush1.bf16.msra.mxu0 0
    %697 = vmatprep.mubr.bf16.mxu0 0
    %698 = vmatmul.mubr.bf16.gmra.mrb[0].mxu0 %v659
    %v699 = vpop.f32.mrb[0].mxu0
    %v700 = vadd.f32 0.0, %v699
    %v701 = vpop.f32.mrb[0].mxu0
    %v702 = vpop.f32.mrb[0].mxu0
    %v703 = vpop.f32.mrb[0].mxu0
    %704 = vdwg.mxu0
    %v706 = vsel %vm224, %v664, 0
    %708 = vmatprep.subr.bf16.mxu0 0
    %709 = vmatpush1.bf16.msra.mxu0 %v216
    %710 = vmatprep.subr.bf16.mxu0 0
    %711 = vmatpush1.bf16.msra.mxu0 %v217
    %712 = vmatprep.subr.bf16.mxu0 0
    %713 = vmatpush1.bf16.msra.mxu0 %v218
    %714 = vmatprep.subr.bf16.mxu0 0
    %715 = vmatpush1.bf16.msra.mxu0 %v219
    %716 = vmatprep.subr.bf16.mxu0 0
    %717 = vmatpush1.bf16.msra.mxu0 0
    %718 = vmatprep.subr.bf16.mxu0 0
    %719 = vmatpush1.bf16.msra.mxu0 0
    %720 = vmatprep.subr.bf16.mxu0 0
    %721 = vmatpush1.bf16.msra.mxu0 0
    %722 = vmatprep.subr.bf16.mxu0 0
    %723 = vmatpush1.bf16.msra.mxu0 0
    %724 = vmatprep.subr.bf16.mxu0 0
    %725 = vmatpush1.bf16.msra.mxu0 0
    %726 = vmatprep.subr.bf16.mxu0 0
    %727 = vmatpush1.bf16.msra.mxu0 0
    %728 = vmatprep.subr.bf16.mxu0 0
    %729 = vmatpush1.bf16.msra.mxu0 0
    %730 = vmatprep.subr.bf16.mxu0 0
    %731 = vmatpush1.bf16.msra.mxu0 0
    %732 = vmatprep.subr.bf16.mxu0 0
    %733 = vmatpush1.bf16.msra.mxu0 0
    %734 = vmatprep.subr.bf16.mxu0 0
    %735 = vmatpush1.bf16.msra.mxu0 0
    %736 = vmatprep.subr.bf16.mxu0 0
    %737 = vmatpush1.bf16.msra.mxu0 0
    %738 = vmatprep.subr.bf16.mxu0 0
    %739 = vmatpush1.bf16.msra.mxu0 0
    %740 = vmatprep.mubr.bf16.mxu0 0
    %741 = vmatmul.mubr.bf16.gmra.mrb[0].mxu0 %v706
    %v742 = vpop.f32.mrb[0].mxu0
    %v743 = vadd.f32 %v700, %v742
    %v744 = vpop.f32.mrb[0].mxu0
    %v745 = vpop.f32.mrb[0].mxu0
    %v746 = vpop.f32.mrb[0].mxu0
    %747 = vdwg.mxu0
    %v748 = vadd.f32 %v743, %v109
    %v749 = vmul.f32 %v661, 0.935507
    %v750 = vadd.f32 %v749, %v748
    %vm751 = vcmp.gt.f32.partialorder %v750, 1.0
    %v752 = vsel %vm751, 1, 0
    %v753 = vcvt.s32.f32 %v752
    %v754 = vpack.c.bf16 %v753, %v753
    %v755 = vsub.f32 %v750, 1.0
    %v756 = vsel %vm751, %v755, %v750
    %v758 = vrot.slane %v754, 4
    %760 = vst [vmem:[#allocation2 + $0x10] sm:$0xf0] %v758
    %s761 = scalar_lea.vmem [#allocation3], 24
    %v762 = vld [vmem:[%s761] sm:$0xf]
    %763 = vmatprep.subr.bf16.mxu0 0
    %764 = vmatpush1.bf16.msra.mxu0 %v144
    %765 = vmatprep.subr.bf16.mxu0 0
    %766 = vmatpush1.bf16.msra.mxu0 %v145
    %767 = vmatprep.subr.bf16.mxu0 0
    %768 = vmatpush1.bf16.msra.mxu0 %v146
    %769 = vmatprep.subr.bf16.mxu0 0
    %770 = vmatpush1.bf16.msra.mxu0 %v147
    %771 = vmatprep.subr.bf16.mxu0 0
    %772 = vmatpush1.bf16.msra.mxu0 %v148
    %773 = vmatprep.subr.bf16.mxu0 0
    %774 = vmatpush1.bf16.msra.mxu0 %v149
    %775 = vmatprep.subr.bf16.mxu0 0
    %776 = vmatpush1.bf16.msra.mxu0 %v150
    %777 = vmatprep.subr.bf16.mxu0 0
    %778 = vmatpush1.bf16.msra.mxu0 %v151
    %779 = vmatprep.subr.bf16.mxu0 0
    %780 = vmatpush1.bf16.msra.mxu0 0
    %781 = vmatprep.subr.bf16.mxu0 0
    %782 = vmatpush1.bf16.msra.mxu0 0
    %783 = vmatprep.subr.bf16.mxu0 0
    %784 = vmatpush1.bf16.msra.mxu0 0
    %785 = vmatprep.subr.bf16.mxu0 0
    %786 = vmatpush1.bf16.msra.mxu0 0
    %787 = vmatprep.subr.bf16.mxu0 0
    %788 = vmatpush1.bf16.msra.mxu0 0
    %789 = vmatprep.subr.bf16.mxu0 0
    %790 = vmatpush1.bf16.msra.mxu0 0
    %791 = vmatprep.subr.bf16.mxu0 0
    %792 = vmatpush1.bf16.msra.mxu0 0
    %793 = vmatprep.subr.bf16.mxu0 0
    %794 = vmatpush1.bf16.msra.mxu0 0
    %795 = vmatprep.mubr.bf16.mxu0 0
    %796 = vmatmul.mubr.bf16.gmra.mrb[0].mxu0 %v754
    %v797 = vpop.f32.mrb[0].mxu0
    %v798 = vadd.f32 0.0, %v797
    %v799 = vpop.f32.mrb[0].mxu0
    %v800 = vpop.f32.mrb[0].mxu0
    %v801 = vpop.f32.mrb[0].mxu0
    %802 = vdwg.mxu0
    %v804 = vsel %vm224, %v762, 0
    %806 = vmatprep.subr.bf16.mxu0 0
    %807 = vmatpush1.bf16.msra.mxu0 %v216
    %808 = vmatprep.subr.bf16.mxu0 0
    %809 = vmatpush1.bf16.msra.mxu0 %v217
    %810 = vmatprep.subr.bf16.mxu0 0
    %811 = vmatpush1.bf16.msra.mxu0 %v218
    %812 = vmatprep.subr.bf16.mxu0 0
    %813 = vmatpush1.bf16.msra.mxu0 %v219
    %814 = vmatprep.subr.bf16.mxu0 0
    %815 = vmatpush1.bf16.msra.mxu0 0
    %816 = vmatprep.subr.bf16.mxu0 0
    %817 = vmatpush1.bf16.msra.mxu0 0
    %818 = vmatprep.subr.bf16.mxu0 0
    %819 = vmatpush1.bf16.msra.mxu0 0
    %820 = vmatprep.subr.bf16.mxu0 0
    %821 = vmatpush1.bf16.msra.mxu0 0
    %822 = vmatprep.subr.bf16.mxu0 0
    %823 = vmatpush1.bf16.msra.mxu0 0
    %824 = vmatprep.subr.bf16.mxu0 0
    %825 = vmatpush1.bf16.msra.mxu0 0
    %826 = vmatprep.subr.bf16.mxu0 0
    %827 = vmatpush1.bf16.msra.mxu0 0
    %828 = vmatprep.subr.bf16.mxu0 0
    %829 = vmatpush1.bf16.msra.mxu0 0
    %830 = vmatprep.subr.bf16.mxu0 0
    %831 = vmatpush1.bf16.msra.mxu0 0
    %832 = vmatprep.subr.bf16.mxu0 0
    %833 = vmatpush1.bf16.msra.mxu0 0
    %834 = vmatprep.subr.bf16.mxu0 0
    %835 = vmatpush1.bf16.msra.mxu0 0
    %836 = vmatprep.subr.bf16.mxu0 0
    %837 = vmatpush1.bf16.msra.mxu0 0
    %838 = vmatprep.mubr.bf16.mxu0 0
    %839 = vmatmul.mubr.bf16.gmra.mrb[0].mxu0 %v804
    %v840 = vpop.f32.mrb[0].mxu0
    %v841 = vadd.f32 %v798, %v840
    %v842 = vpop.f32.mrb[0].mxu0
    %v843 = vpop.f32.mrb[0].mxu0
    %v844 = vpop.f32.mrb[0].mxu0
    %845 = vdwg.mxu0
    %v846 = vadd.f32 %v841, %v109
    %v847 = vmul.f32 %v756, 0.935507
    %v848 = vadd.f32 %v847, %v846
    %vm849 = vcmp.gt.f32.partialorder %v848, 1.0
    %v850 = vsel %vm849, 1, 0
    %v851 = vcvt.s32.f32 %v850
    %v852 = vpack.c.bf16 %v851, %v851
    %v853 = vsub.f32 %v848, 1.0
    %v854 = vsel %vm849, %v853, %v848
    %855 = vst [vmem:[#allocation2 + $0x18] sm:$0xf] %v852
    %s856 = scalar_lea.vmem [#allocation3], 28
    %v857 = vld [vmem:[%s856] sm:$0xf]
    %858 = vmatprep.subr.bf16.mxu0 0
    %859 = vmatpush1.bf16.msra.mxu0 %v144
    %860 = vmatprep.subr.bf16.mxu0 0
    %861 = vmatpush1.bf16.msra.mxu0 %v145
    %862 = vmatprep.subr.bf16.mxu0 0
    %863 = vmatpush1.bf16.msra.mxu0 %v146
    %864 = vmatprep.subr.bf16.mxu0 0
    %865 = vmatpush1.bf16.msra.mxu0 %v147
    %866 = vmatprep.subr.bf16.mxu0 0
    %867 = vmatpush1.bf16.msra.mxu0 %v148
    %868 = vmatprep.subr.bf16.mxu0 0
    %869 = vmatpush1.bf16.msra.mxu0 %v149
    %870 = vmatprep.subr.bf16.mxu0 0
    %871 = vmatpush1.bf16.msra.mxu0 %v150
    %872 = vmatprep.subr.bf16.mxu0 0
    %873 = vmatpush1.bf16.msra.mxu0 %v151
    %874 = vmatprep.subr.bf16.mxu0 0
    %875 = vmatpush1.bf16.msra.mxu0 0
    %876 = vmatprep.subr.bf16.mxu0 0
    %877 = vmatpush1.bf16.msra.mxu0 0
    %878 = vmatprep.subr.bf16.mxu0 0
    %879 = vmatpush1.bf16.msra.mxu0 0
    %880 = vmatprep.subr.bf16.mxu0 0
    %881 = vmatpush1.bf16.msra.mxu0 0
    %882 = vmatprep.subr.bf16.mxu0 0
    %883 = vmatpush1.bf16.msra.mxu0 0
    %884 = vmatprep.subr.bf16.mxu0 0
    %885 = vmatpush1.bf16.msra.mxu0 0
    %886 = vmatprep.subr.bf16.mxu0 0
    %887 = vmatpush1.bf16.msra.mxu0 0
    %888 = vmatprep.subr.bf16.mxu0 0
    %889 = vmatpush1.bf16.msra.mxu0 0
    %890 = vmatprep.mubr.bf16.mxu0 0
    %891 = vmatmul.mubr.bf16.gmra.mrb[0].mxu0 %v852
    %v892 = vpop.f32.mrb[0].mxu0
    %v893 = vadd.f32 0.0, %v892
    %v894 = vpop.f32.mrb[0].mxu0
    %v895 = vpop.f32.mrb[0].mxu0
    %v896 = vpop.f32.mrb[0].mxu0
    %897 = vdwg.mxu0
    %v899 = vsel %vm224, %v857, 0
    %901 = vmatprep.subr.bf16.mxu0 0
    %902 = vmatpush1.bf16.msra.mxu0 %v216
    %903 = vmatprep.subr.bf16.mxu0 0
    %904 = vmatpush1.bf16.msra.mxu0 %v217
    %905 = vmatprep.subr.bf16.mxu0 0
    %906 = vmatpush1.bf16.msra.mxu0 %v218
    %907 = vmatprep.subr.bf16.mxu0 0
    %908 = vmatpush1.bf16.msra.mxu0 %v219
    %909 = vmatprep.subr.bf16.mxu0 0
    %910 = vmatpush1.bf16.msra.mxu0 0
    %911 = vmatprep.subr.bf16.mxu0 0
    %912 = vmatpush1.bf16.msra.mxu0 0
    %913 = vmatprep.subr.bf16.mxu0 0
    %914 = vmatpush1.bf16.msra.mxu0 0
    %915 = vmatprep.subr.bf16.mxu0 0
    %916 = vmatpush1.bf16.msra.mxu0 0
    %917 = vmatprep.subr.bf16.mxu0 0
    %918 = vmatpush1.bf16.msra.mxu0 0
    %919 = vmatprep.subr.bf16.mxu0 0
    %920 = vmatpush1.bf16.msra.mxu0 0
    %921 = vmatprep.subr.bf16.mxu0 0
    %922 = vmatpush1.bf16.msra.mxu0 0
    %923 = vmatprep.subr.bf16.mxu0 0
    %924 = vmatpush1.bf16.msra.mxu0 0
    %925 = vmatprep.subr.bf16.mxu0 0
    %926 = vmatpush1.bf16.msra.mxu0 0
    %927 = vmatprep.subr.bf16.mxu0 0
    %928 = vmatpush1.bf16.msra.mxu0 0
    %929 = vmatprep.subr.bf16.mxu0 0
    %930 = vmatpush1.bf16.msra.mxu0 0
    %931 = vmatprep.subr.bf16.mxu0 0
    %932 = vmatpush1.bf16.msra.mxu0 0
    %933 = vmatprep.mubr.bf16.mxu0 0
    %934 = vmatmul.mubr.bf16.gmra.mrb[0].mxu0 %v899
    %v935 = vpop.f32.mrb[0].mxu0
    %v936 = vadd.f32 %v893, %v935
    %v937 = vpop.f32.mrb[0].mxu0
    %v938 = vpop.f32.mrb[0].mxu0
    %v939 = vpop.f32.mrb[0].mxu0
    %940 = vdwg.mxu0
    %v941 = vadd.f32 %v936, %v109
    %v942 = vmul.f32 %v854, 0.935507
    %v943 = vadd.f32 %v942, %v941
    %vm944 = vcmp.gt.f32.partialorder %v943, 1.0
    %v945 = vsel %vm944, 1, 0
    %v946 = vcvt.s32.f32 %v945
    %v947 = vpack.c.bf16 %v946, %v946
    %v949 = vrot.slane %v947, 4
    %951 = vst [vmem:[#allocation2 + $0x18] sm:$0xf0] %v949
    %v952 = vld [vmem:[#allocation2] sm:$0xff]
    %v953 = vld [vmem:[#allocation2 + $0x8] sm:$0xff]
    %v954 = vld [vmem:[#allocation2 + $0x10] sm:$0xff]
    %v955 = vld [vmem:[#allocation2 + $0x18] sm:$0xff]
    %v956 = vunpack.c.l.bf16 %v952
    %v957 = vunpack.c.h.bf16 %v952
    %v958 = vunpack.c.l.bf16 %v953
    %v959 = vunpack.c.h.bf16 %v953
    %v960 = vunpack.c.l.bf16 %v954
    %v961 = vunpack.c.h.bf16 %v954
    %v962 = vunpack.c.l.bf16 %v955
    %v963 = vunpack.c.h.bf16 %v955
    %v964 = vld [vmem:[#allocation9] sm:$0xff]
    %v965 = vld [vmem:[#allocation9 + $0x8] sm:$0xff]
    %v966 = vld [vmem:[#allocation9 + $0x10] sm:$0xff]
    %v967 = vld [vmem:[#allocation9 + $0x18] sm:$0xff]
    %v968 = vld [vmem:[#allocation9 + $0x20] sm:$0xff]
    %v969 = vld [vmem:[#allocation9 + $0x28] sm:$0xff]
    %v970 = vld [vmem:[#allocation9 + $0x30] sm:$0xff]
    %v971 = vld [vmem:[#allocation9 + $0x38] sm:$0xff]
    %v972 = vld [vmem:[#allocation9 + $0x40] sm:$0xff]
    %v973 = vld [vmem:[#allocation9 + $0x48] sm:$0xff]
    %v974 = vld [vmem:[#allocation9 + $0x50] sm:$0xff]
    %v975 = vld [vmem:[#allocation9 + $0x58] sm:$0xff]
    %v976 = vld [vmem:[#allocation9 + $0x60] sm:$0xff]
    %v977 = vld [vmem:[#allocation9 + $0x68] sm:$0xff]
    %v978 = vld [vmem:[#allocation9 + $0x70] sm:$0xff]
    %v979 = vld [vmem:[#allocation9 + $0x78] sm:$0xff]
    %v980 = vld [vmem:[%s5] sm:$0x1]
    %v982 = vlaneseq
    %v983 = vshrl.u32 %v982, 7
    %v984 = vsub.s32 0, %v983
    %v985 = vrot.slane %v980, %v984
    %987 = vmatprep.subr.mxu0 0.0
    %988 = vmatpush1.msra.mxu0 %v964
    %989 = vmatprep.subr.mxu0 0.0
    %990 = vmatpush1.msra.mxu0 %v965
    %991 = vmatprep.subr.mxu0 0.0
    %992 = vmatpush1.msra.mxu0 %v966
    %993 = vmatprep.subr.mxu0 0.0
    %994 = vmatpush1.msra.mxu0 %v967
    %995 = vmatprep.subr.mxu0 0.0
    %996 = vmatpush1.msra.mxu0 %v968
    %997 = vmatprep.subr.mxu0 0.0
    %998 = vmatpush1.msra.mxu0 %v969
    %999 = vmatprep.subr.mxu0 0.0
    %1000 = vmatpush1.msra.mxu0 %v970
    %1001 = vmatprep.subr.mxu0 0.0
    %1002 = vmatpush1.msra.mxu0 %v971
    %1003 = vmatprep.subr.mxu0 0.0
    %1004 = vmatpush1.msra.mxu0 %v972
    %1005 = vmatprep.subr.mxu0 0.0
    %1006 = vmatpush1.msra.mxu0 %v973
    %1007 = vmatprep.subr.mxu0 0.0
    %1008 = vmatpush1.msra.mxu0 %v974
    %1009 = vmatprep.subr.mxu0 0.0
    %1010 = vmatpush1.msra.mxu0 %v975
    %1011 = vmatprep.subr.mxu0 0.0
    %1012 = vmatpush1.msra.mxu0 %v976
    %1013 = vmatprep.subr.mxu0 0.0
    %1014 = vmatpush1.msra.mxu0 %v977
    %1015 = vmatprep.subr.mxu0 0.0
    %1016 = vmatpush1.msra.mxu0 %v978
    %1017 = vmatprep.subr.mxu0 0.0
    %1018 = vmatpush1.msra.mxu0 %v979
    %1019 = vmatprep.subr.mxu0 0.0
    %1020 = vmatpush1.msra.mxu0 0.0
    %1021 = vmatprep.subr.mxu0 0.0
    %1022 = vmatpush1.msra.mxu0 0.0
    %1023 = vmatprep.subr.mxu0 0.0
    %1024 = vmatpush1.msra.mxu0 0.0
    %1025 = vmatprep.subr.mxu0 0.0
    %1026 = vmatpush1.msra.mxu0 0.0
    %1027 = vmatprep.subr.mxu0 0.0
    %1028 = vmatpush1.msra.mxu0 0.0
    %1029 = vmatprep.subr.mxu0 0.0
    %1030 = vmatpush1.msra.mxu0 0.0
    %1031 = vmatprep.subr.mxu0 0.0
    %1032 = vmatpush1.msra.mxu0 0.0
    %1033 = vmatprep.subr.mxu0 0.0
    %1034 = vmatpush1.msra.mxu0 0.0
    %1035 = vmatprep.subr.mxu0 0.0
    %1036 = vmatpush1.msra.mxu0 0.0
    %1037 = vmatprep.subr.mxu0 0.0
    %1038 = vmatpush1.msra.mxu0 0.0
    %1039 = vmatprep.subr.mxu0 0.0
    %1040 = vmatpush1.msra.mxu0 0.0
    %1041 = vmatprep.subr.mxu0 0.0
    %1042 = vmatpush1.msra.mxu0 0.0
    %1043 = vmatprep.subr.mxu0 0.0
    %1044 = vmatpush1.msra.mxu0 0.0
    %1045 = vmatprep.subr.mxu0 0.0
    %1046 = vmatpush1.msra.mxu0 0.0
    %1047 = vmatprep.subr.mxu0 0.0
    %1048 = vmatpush1.msra.mxu0 0.0
    %1049 = vmatprep.subr.mxu0 0.0
    %1050 = vmatpush1.msra.mxu0 0.0
    %1051 = vmatprep.mubr.f32.mxu0 0.0
    %1052 = vmatmul.mubr.f32.gmra.mrb[0].mxu0 %v956
    %v1053 = vpop.f32.mrb[0].mxu0
    %v1054 = vadd.f32 %v985, %v1053
    %v1055 = vpop.f32.mrb[0].mxu0
    %1056 = vmatprep.mubr.f32.mxu0 0.0
    %1057 = vmatmul.mubr.f32.gmra.mrb[0].mxu0 %v957
    %v1058 = vpop.f32.mrb[0].mxu0
    %v1059 = vadd.f32 %v985, %v1058
    %v1060 = vpop.f32.mrb[0].mxu0
    %1061 = vmatprep.mubr.f32.mxu0 0.0
    %1062 = vmatmul.mubr.f32.gmra.mrb[0].mxu0 %v958
    %v1063 = vpop.f32.mrb[0].mxu0
    %v1064 = vadd.f32 %v985, %v1063
    %v1065 = vpop.f32.mrb[0].mxu0
    %1066 = vmatprep.mubr.f32.mxu0 0.0
    %1067 = vmatmul.mubr.f32.gmra.mrb[0].mxu0 %v959
    %v1068 = vpop.f32.mrb[0].mxu0
    %v1069 = vadd.f32 %v985, %v1068
    %v1070 = vpop.f32.mrb[0].mxu0
    %1071 = vmatprep.mubr.f32.mxu0 0.0
    %1072 = vmatmul.mubr.f32.gmra.mrb[0].mxu0 %v960
    %v1073 = vpop.f32.mrb[0].mxu0
    %v1074 = vadd.f32 %v985, %v1073
    %v1075 = vpop.f32.mrb[0].mxu0
    %1076 = vmatprep.mubr.f32.mxu0 0.0
    %1077 = vmatmul.mubr.f32.gmra.mrb[0].mxu0 %v961
    %v1078 = vpop.f32.mrb[0].mxu0
    %v1079 = vadd.f32 %v985, %v1078
    %v1080 = vpop.f32.mrb[0].mxu0
    %1081 = vmatprep.mubr.f32.mxu0 0.0
    %1082 = vmatmul.mubr.f32.gmra.mrb[0].mxu0 %v962
    %v1083 = vpop.f32.mrb[0].mxu0
    %v1084 = vadd.f32 %v985, %v1083
    %v1085 = vpop.f32.mrb[0].mxu0
    %1086 = vmatprep.mubr.f32.mxu0 0.0
    %1087 = vmatmul.mubr.f32.gmra.mrb[0].mxu0 %v963
    %v1088 = vpop.f32.mrb[0].mxu0
    %v1089 = vadd.f32 %v985, %v1088
    %v1090 = vpop.f32.mrb[0].mxu0
    %1091 = vdwg.mxu0
    %v1092 = vadd.f32 %v1054, 0.0
    %1093 = vst [vmem:[#allocation11] sm:$0xff] %v1092
    %v1094 = vmul.f32 %v1092, 0.8187308
    %v1095 = vadd.f32 %v1094, %v1059
    %s1096 = scalar_lea.vmem [#allocation11], 8
    %1097 = vst [vmem:[%s1096] sm:$0xff] %v1095
    %v1098 = vmul.f32 %v1095, 0.8187308
    %v1099 = vadd.f32 %v1098, %v1064
    %s1100 = scalar_lea.vmem [#allocation11], 16
    %1101 = vst [vmem:[%s1100] sm:$0xff] %v1099
    %v1102 = vmul.f32 %v1099, 0.8187308
    %v1103 = vadd.f32 %v1102, %v1069
    %s1104 = scalar_lea.vmem [#allocation11], 24
    %1105 = vst [vmem:[%s1104] sm:$0xff] %v1103
    %v1106 = vmul.f32 %v1103, 0.8187308
    %v1107 = vadd.f32 %v1106, %v1074
    %s1108 = scalar_lea.vmem [#allocation11], 32
    %1109 = vst [vmem:[%s1108] sm:$0xff] %v1107
    %v1110 = vmul.f32 %v1107, 0.8187308
    %v1111 = vadd.f32 %v1110, %v1079
    %s1112 = scalar_lea.vmem [#allocation11], 40
    %1113 = vst [vmem:[%s1112] sm:$0xff] %v1111
    %v1114 = vmul.f32 %v1111, 0.8187308
    %v1115 = vadd.f32 %v1114, %v1084
    %s1116 = scalar_lea.vmem [#allocation11], 48
    %1117 = vst [vmem:[%s1116] sm:$0xff] %v1115
    %v1118 = vmul.f32 %v1115, 0.8187308
    %v1119 = vadd.f32 %v1118, %v1089
    %s1120 = scalar_lea.vmem [#allocation11], 56
    %1121 = vst [vmem:[%s1120] sm:$0xff] %v1119
    // Predicated region
    $region42: #{tpu_custom_call.1} parent=1 // pred_check
      _
    $region43: #{tpu_custom_call.1} parent=1 // pred_check_branch
      %1123 = sbr.rel (0) target = $region45
    $region44: #{tpu_custom_call.1} parent=1 // pred_region
      %s1125 = ssub.s32 1024, 1024
      %1126 = vsyncadd [#allocation5], %s1125
      %s1127 = sshll.u32 [#allocation11], 4
      %s1128 = int_to_ptr.vmem [resolvable:$true] %s1127
      %1133 = dma.vmem_to_hbm [thread:$0]  %s1128, 1024, %s6, [#allocation5], 128, 128, 8
    $region45: #{tpu_custom_call.1} parent=1 // pred_fallthru
      _
    // Predicated region
    $region46: #{tpu_custom_call.1} parent=1 // pred_check
      _
    $region47: #{tpu_custom_call.1} parent=1 // pred_check_branch
      %1135 = sbr.rel (0) target = $region49
    $region48: #{tpu_custom_call.1} parent=1 // pred_region
      %1136 = dma.done [#allocation5], 1024
    $region49: #{tpu_custom_call.1} parent=1 // pred_fallthru
      _
    %1137 = vsyncpa [#allocation4], 1
    %1138 = vsyncpa [#allocation7], 1
    %1139 = vsyncpa [#allocation10], 1
    %1140 = vsyncpa [#allocation5], 1

</llo_original>
